<compile_context>
chip_gen: v7x
topology: tpu7x:2x2x1
jax: 0.10.0
libtpu: 0.0.40
codegen_flags: <defaults>
</compile_context>

<pallas_src>
import functools

import jax
import jax.numpy as jnp
from jax import lax
from jax.experimental import pallas as pl
from jax.experimental.pallas import tpu as pltpu

CIN = 3
COUT = 3
KH = KW = 3
EPS = 1e-5  # nn.LayerNorm default


def _widx(co, ci, kh, kw):
    # conv weight flattened in OIHW order
    return ((co * CIN + ci) * KH + kh) * KW + kw


def _kernel(x_ref, mask_ref, w_ref, cb_ref, gam_ref, bet_ref, o_ref, *, W):
    # x_ref   : (CIN, n_img, L)      VMEM  channel-major, batch on sublanes
    # mask_ref: (4, L)               VMEM  boundary rows: row>=1, row<=H-2,
    #                                      col>=1, col<=W-2 (0.0 / 1.0)
    # w_ref   : (COUT*CIN*KH*KW,)    SMEM  conv weight, OIHW flattened
    # cb_ref  : (COUT,)              SMEM  conv bias
    # gam_ref : (COUT,)              SMEM  layernorm gamma
    # bet_ref : (COUT,)              SMEM  layernorm beta
    # o_ref   : (COUT, n_img, L)     VMEM
    n_img = x_ref.shape[1]
    L = x_ref.shape[2]

    # 4 base boundary rows, (1, L) each; corner taps combine two on the fly.
    m_top = mask_ref[0:1, :]   # valid when the tap reads dh = -1
    m_bot = mask_ref[1:2, :]   # dh = +1
    m_lft = mask_ref[2:3, :]   # dw = -1
    m_rgt = mask_ref[3:4, :]   # dw = +1

    def tap_mask(dh, dw):
        m = None
        if dh == -1:
            m = m_top
        elif dh == 1:
            m = m_bot
        if dw == -1:
            m = m_lft if m is None else m * m_lft
        elif dw == 1:
            m = m_rgt if m is None else m * m_rgt
        return m

    # Per-channel (n_img, L) planes, loaded once (batch on sublanes).
    x_ch = [x_ref[ci] for ci in range(CIN)]

    inv_c = 1.0 / COUT
    # Conv bias folded into accumulator init (emitted once per grid step).
    acc = [jnp.full((n_img, L), cb_ref[co], dtype=jnp.float32) for co in range(COUT)]

    # 3x3 conv: each tap (dh, dw) is a lane roll (XLU) of the flattened plane;
    # out-of-image tap reads are zeroed via the boundary masks (== zero pad=1).
    for dh in (-1, 0, 1):
        for dw in (-1, 0, 1):
            shift = (-(dh * W + dw)) % L
            m = tap_mask(dh, dw)
            for ci in range(CIN):
                s = x_ch[ci] if shift == 0 else pltpu.roll(x_ch[ci], shift=shift, axis=1)
                if m is not None:
                    s = s * m          # mask once per rolled channel plane
                for co in range(COUT):
                    acc[co] = acc[co] + w_ref[_widx(co, ci, dh + 1, dw + 1)] * s

    # LayerNorm over the 3 channels per pixel (biased var, eps inside rsqrt)
    mu = (acc[0] + acc[1] + acc[2]) * inv_c
    d = [a - mu for a in acc]
    var = (d[0] * d[0] + d[1] * d[1] + d[2] * d[2]) * inv_c
    inv = lax.rsqrt(var + EPS)

    for co in range(COUT):
        y = d[co] * (inv * gam_ref[co]) + bet_ref[co]   # gamma folded into inv
        o_ref[co] = jnp.maximum(y, 0.0)                 # ReLU, dense (n_img, L) store


def _pick_batch_tile(B, L):
    """Images per grid step (= sublane extent of each block)."""
    per_img_bytes = 4 * (CIN + COUT) * L
    if B <= 8:
        # Single fat step: block dim == full B satisfies the sublane rule, and
        # at tiny batch the kernel is pure per-step overhead (v5e/v6e: 1 TC).
        return B
    # n_img must be a multiple of 8 (sublane rule) for B > 8.
    budget = 16 * 1024 * 1024  # double-buffered blocks stay well inside v7x VMEM
    max_by_vmem = max(8, (budget // (2 * per_img_bytes)) // 8 * 8)
    if B >= 16:
        # Two balanced fat steps so both v7x TensorCores get work.
        target = ((pl.cdiv(B, 2) + 7) // 8) * 8
    else:
        target = 8
    return int(min(64, max_by_vmem, target))


def _make_boundary_rows(H, W):
    """(4, L) float32 boundary-validity rows: row>=1, row<=H-2, col>=1, col<=W-2.
    Built in the wrapper so no integer div/mod runs on the VPU."""
    L = H * W
    idx = jnp.arange(L, dtype=jnp.int32)
    row = idx // W
    col = idx % W
    rows = jnp.stack([row >= 1, row <= H - 2, col >= 1, col <= W - 2], axis=0)
    return rows.astype(jnp.float32)


@jax.jit
def layernorm_model_forward(x, conv_w, conv_b, ln_g, ln_b):
    """x: (B, 3, H, W) float32 -> (B, H*W, 3) float32 (same as the torch module)."""
    B, Cin, H, W = x.shape
    assert Cin == CIN
    L = H * W

    # Channel-major relayout: batch on sublanes, flattened pixels on lanes.
    xr = x.reshape(B, CIN, L).transpose(1, 0, 2)          # (CIN, B, L)
    w_flat = conv_w.reshape(-1).astype(jnp.float32)
    bmask = _make_boundary_rows(H, W)                     # (4, L)

    n_img = _pick_batch_tile(B, L)
    grid = (pl.cdiv(B, n_img),)

    # VMEM budget from the real double-buffered block sizes (+ mask + headroom),
    # clamped to 48 MiB so it always fits v7x's 64 MiB physical VMEM.
    block_bytes = 4 * n_img * (CIN + COUT) * L
    mask_bytes = 4 * 4 * L
    vmem_limit = int(min(48 * 1024 * 1024,
                         max(4 * 1024 * 1024,
                             2 * (block_bytes + mask_bytes) + 2 * 1024 * 1024)))

    kernel = functools.partial(_kernel, W=W)
    out_cm = pl.pallas_call(
        kernel,
        out_shape=jax.ShapeDtypeStruct((COUT, B, L), jnp.float32),
        grid=grid,
        in_specs=[
            pl.BlockSpec((CIN, n_img, L), lambda i: (0, i, 0)),
            pl.BlockSpec((4, L), lambda i: (0, 0)),
            pl.BlockSpec(memory_space=pltpu.MemorySpace.SMEM),
            pl.BlockSpec(memory_space=pltpu.MemorySpace.SMEM),
            pl.BlockSpec(memory_space=pltpu.MemorySpace.SMEM),
            pl.BlockSpec(memory_space=pltpu.MemorySpace.SMEM),
        ],
        out_specs=pl.BlockSpec((COUT, n_img, L), lambda i: (0, i, 0)),
        compiler_params=pltpu.CompilerParams(
            dimension_semantics=("parallel",),
            vmem_limit_bytes=vmem_limit,
        ),
    )(xr, bmask, w_flat,
      conv_b.astype(jnp.float32), ln_g.astype(jnp.float32), ln_b.astype(jnp.float32))

    # PyTorch glue: x.view(B, C, L).permute(0, 2, 1) -> (B, L, C)
    return out_cm.transpose(1, 2, 0)


def _reference_forward(x, conv_w, conv_b, ln_g, ln_b):
    """Pure-JAX reference for correctness checking."""
    y = lax.conv_general_dilated(
        x, conv_w, window_strides=(1, 1), padding=((1, 1), (1, 1)),
        dimension_numbers=("NCHW", "OIHW", "NCHW"))
    y = y + conv_b[None, :, None, None]
    B = x.shape[0]
    y = y.reshape(B, COUT, -1).transpose(0, 2, 1)  # (B, L, C)
    mu = y.mean(-1, keepdims=True)
    var = ((y - mu) ** 2).mean(-1, keepdims=True)
    y = (y - mu) / jnp.sqrt(var + EPS) * ln_g + ln_b
    return jnp.maximum(y, 0.0)


if __name__ == "__main__":
    key = jax.random.PRNGKey(0)
    k_x, k_w, k_b = jax.random.split(key, 3)

    B, H, W = 2, 16, 16
    x = jax.random.normal(k_x, (B, CIN, H, W), dtype=jnp.float32)

    # Deterministic parameter init (synthetic; shapes match nn.Conv2d / nn.LayerNorm).
    conv_w = 0.2 * jax.random.normal(k_w, (COUT, CIN, KH, KW), dtype=jnp.float32)
    conv_b = 0.1 * jax.random.normal(k_b, (COUT,), dtype=jnp.float32)
    ln_g = jnp.ones((COUT,), dtype=jnp.float32)   # nn.LayerNorm default weight
    ln_b = jnp.zeros((COUT,), dtype=jnp.float32)  # nn.LayerNorm default bias

    out = layernorm_model_forward(x, conv_w, conv_b, ln_g, ln_b)
    out = jax.block_until_ready(out)

    ref = _reference_forward(x, conv_w, conv_b, ln_g, ln_b)
    assert out.shape == (B, H * W, COUT), out.shape
    max_err = float(jnp.max(jnp.abs(out - ref)))
    assert jnp.allclose(out, ref, rtol=1e-4, atol=1e-4), max_err

    print("KERNEL_OK")
</pallas_src>

<mosaic_0001>
module attributes {stable_mosaic.version = 11 : i64} {
  func.func @_kernel(%arg0: i32, %arg1: memref<3x2x256xf32, #tpu.memory_space<vmem>>, %arg2: memref<4x256xf32, #tpu.memory_space<vmem>>, %arg3: memref<81xf32, #tpu.memory_space<smem>>, %arg4: memref<3xf32, #tpu.memory_space<smem>>, %arg5: memref<3xf32, #tpu.memory_space<smem>>, %arg6: memref<3xf32, #tpu.memory_space<smem>>, %arg7: memref<3x2x256xf32, #tpu.memory_space<vmem>>) attributes {dimension_semantics = [#tpu.dimension_semantics<parallel>], iteration_bounds = array<i64: 1>, scalar_prefetch = 0 : i64, scratch_operands = 0 : i64, tpu.core_type = #tpu.core_type<tc>, window_params = [{transform_indices = @transform_0, window_bounds = array<i64: 3, 2, 256>}, {pipeline_mode = #tpu.pipeline_mode<synchronous>, transform_indices = @transform_1, window_bounds = array<i64: 4, 256>}, {transform_indices = @transform_2, window_bounds = array<i64: 81>}, {transform_indices = @transform_3, window_bounds = array<i64: 3>}, {transform_indices = @transform_4, window_bounds = array<i64: 3>}, {transform_indices = @transform_5, window_bounds = array<i64: 3>}, {transform_indices = @transform_6, window_bounds = array<i64: 3, 2, 256>}]} {
    %c0 = arith.constant 0 : index
    %c0_0 = arith.constant 0 : index
    %0 = vector.load %arg2[%c0, %c0_0] : memref<4x256xf32, #tpu.memory_space<vmem>>, vector<1x256xf32>
    %c1 = arith.constant 1 : index
    %c0_1 = arith.constant 0 : index
    %1 = vector.load %arg2[%c1, %c0_1] : memref<4x256xf32, #tpu.memory_space<vmem>>, vector<1x256xf32>
    %c2 = arith.constant 2 : index
    %c0_2 = arith.constant 0 : index
    %2 = vector.load %arg2[%c2, %c0_2] : memref<4x256xf32, #tpu.memory_space<vmem>>, vector<1x256xf32>
    %c3 = arith.constant 3 : index
    %c0_3 = arith.constant 0 : index
    %3 = vector.load %arg2[%c3, %c0_3] : memref<4x256xf32, #tpu.memory_space<vmem>>, vector<1x256xf32>
    %c0_4 = arith.constant 0 : index
    %c0_5 = arith.constant 0 : index
    %c0_6 = arith.constant 0 : index
    %4 = vector.load %arg1[%c0_4, %c0_5, %c0_6] : memref<3x2x256xf32, #tpu.memory_space<vmem>>, vector<1x2x256xf32>
    %5 = vector.shape_cast %4 : vector<1x2x256xf32> to vector<2x256xf32>
    %c1_7 = arith.constant 1 : index
    %c0_8 = arith.constant 0 : index
    %c0_9 = arith.constant 0 : index
    %6 = vector.load %arg1[%c1_7, %c0_8, %c0_9] : memref<3x2x256xf32, #tpu.memory_space<vmem>>, vector<1x2x256xf32>
    %7 = vector.shape_cast %6 : vector<1x2x256xf32> to vector<2x256xf32>
    %c2_10 = arith.constant 2 : index
    %c0_11 = arith.constant 0 : index
    %c0_12 = arith.constant 0 : index
    %8 = vector.load %arg1[%c2_10, %c0_11, %c0_12] : memref<3x2x256xf32, #tpu.memory_space<vmem>>, vector<1x2x256xf32>
    %9 = vector.shape_cast %8 : vector<1x2x256xf32> to vector<2x256xf32>
    %c0_13 = arith.constant 0 : index
    %10 = memref.load %arg4[%c0_13] : memref<3xf32, #tpu.memory_space<smem>>
    %11 = vector.broadcast %10 : f32 to vector<2x256xf32>
    %c1_14 = arith.constant 1 : index
    %12 = memref.load %arg4[%c1_14] : memref<3xf32, #tpu.memory_space<smem>>
    %13 = vector.broadcast %12 : f32 to vector<2x256xf32>
    %c2_15 = arith.constant 2 : index
    %14 = memref.load %arg4[%c2_15] : memref<3xf32, #tpu.memory_space<smem>>
    %15 = vector.broadcast %14 : f32 to vector<2x256xf32>
    %16 = arith.mulf %0, %2 : vector<1x256xf32>
    %c17_i32 = arith.constant 17 : i32
    %17 = tpu.dynamic_rotate %5 by %c17_i32 dim 1 : vector<2x256xf32>, i32 -> vector<2x256xf32>
    %18 = vector.broadcast %16 : vector<1x256xf32> to vector<2x256xf32>
    %19 = arith.mulf %17, %18 : vector<2x256xf32>
    %c0_16 = arith.constant 0 : index
    %20 = memref.load %arg3[%c0_16] : memref<81xf32, #tpu.memory_space<smem>>
    %21 = vector.broadcast %20 : f32 to vector<2x256xf32>
    %22 = arith.mulf %21, %19 : vector<2x256xf32>
    %23 = arith.addf %11, %22 : vector<2x256xf32>
    %c27 = arith.constant 27 : index
    %24 = memref.load %arg3[%c27] : memref<81xf32, #tpu.memory_space<smem>>
    %25 = vector.broadcast %24 : f32 to vector<2x256xf32>
    %26 = arith.mulf %25, %19 : vector<2x256xf32>
    %27 = arith.addf %13, %26 : vector<2x256xf32>
    %c54 = arith.constant 54 : index
    %28 = memref.load %arg3[%c54] : memref<81xf32, #tpu.memory_space<smem>>
    %29 = vector.broadcast %28 : f32 to vector<2x256xf32>
    %30 = arith.mulf %29, %19 : vector<2x256xf32>
    %31 = arith.addf %15, %30 : vector<2x256xf32>
    %c17_i32_17 = arith.constant 17 : i32
    %32 = tpu.dynamic_rotate %7 by %c17_i32_17 dim 1 : vector<2x256xf32>, i32 -> vector<2x256xf32>
    %33 = vector.broadcast %16 : vector<1x256xf32> to vector<2x256xf32>
    %34 = arith.mulf %32, %33 : vector<2x256xf32>
    %c9 = arith.constant 9 : index
    %35 = memref.load %arg3[%c9] : memref<81xf32, #tpu.memory_space<smem>>
    %36 = vector.broadcast %35 : f32 to vector<2x256xf32>
    %37 = arith.mulf %36, %34 : vector<2x256xf32>
    %38 = arith.addf %23, %37 : vector<2x256xf32>
    %c36 = arith.constant 36 : index
    %39 = memref.load %arg3[%c36] : memref<81xf32, #tpu.memory_space<smem>>
    %40 = vector.broadcast %39 : f32 to vector<2x256xf32>
    %41 = arith.mulf %40, %34 : vector<2x256xf32>
    %42 = arith.addf %27, %41 : vector<2x256xf32>
    %c63 = arith.constant 63 : index
    %43 = memref.load %arg3[%c63] : memref<81xf32, #tpu.memory_space<smem>>
    %44 = vector.broadcast %43 : f32 to vector<2x256xf32>
    %45 = arith.mulf %44, %34 : vector<2x256xf32>
    %46 = arith.addf %31, %45 : vector<2x256xf32>
    %c17_i32_18 = arith.constant 17 : i32
    %47 = tpu.dynamic_rotate %9 by %c17_i32_18 dim 1 : vector<2x256xf32>, i32 -> vector<2x256xf32>
    %48 = vector.broadcast %16 : vector<1x256xf32> to vector<2x256xf32>
    %49 = arith.mulf %47, %48 : vector<2x256xf32>
    %c18 = arith.constant 18 : index
    %50 = memref.load %arg3[%c18] : memref<81xf32, #tpu.memory_space<smem>>
    %51 = vector.broadcast %50 : f32 to vector<2x256xf32>
    %52 = arith.mulf %51, %49 : vector<2x256xf32>
    %53 = arith.addf %38, %52 : vector<2x256xf32>
    %c45 = arith.constant 45 : index
    %54 = memref.load %arg3[%c45] : memref<81xf32, #tpu.memory_space<smem>>
    %55 = vector.broadcast %54 : f32 to vector<2x256xf32>
    %56 = arith.mulf %55, %49 : vector<2x256xf32>
    %57 = arith.addf %42, %56 : vector<2x256xf32>
    %c72 = arith.constant 72 : index
    %58 = memref.load %arg3[%c72] : memref<81xf32, #tpu.memory_space<smem>>
    %59 = vector.broadcast %58 : f32 to vector<2x256xf32>
    %60 = arith.mulf %59, %49 : vector<2x256xf32>
    %61 = arith.addf %46, %60 : vector<2x256xf32>
    %c16_i32 = arith.constant 16 : i32
    %62 = tpu.dynamic_rotate %5 by %c16_i32 dim 1 : vector<2x256xf32>, i32 -> vector<2x256xf32>
    %63 = vector.broadcast %0 : vector<1x256xf32> to vector<2x256xf32>
    %64 = arith.mulf %62, %63 : vector<2x256xf32>
    %c1_19 = arith.constant 1 : index
    %65 = memref.load %arg3[%c1_19] : memref<81xf32, #tpu.memory_space<smem>>
    %66 = vector.broadcast %65 : f32 to vector<2x256xf32>
    %67 = arith.mulf %66, %64 : vector<2x256xf32>
    %68 = arith.addf %53, %67 : vector<2x256xf32>
    %c28 = arith.constant 28 : index
    %69 = memref.load %arg3[%c28] : memref<81xf32, #tpu.memory_space<smem>>
    %70 = vector.broadcast %69 : f32 to vector<2x256xf32>
    %71 = arith.mulf %70, %64 : vector<2x256xf32>
    %72 = arith.addf %57, %71 : vector<2x256xf32>
    %c55 = arith.constant 55 : index
    %73 = memref.load %arg3[%c55] : memref<81xf32, #tpu.memory_space<smem>>
    %74 = vector.broadcast %73 : f32 to vector<2x256xf32>
    %75 = arith.mulf %74, %64 : vector<2x256xf32>
    %76 = arith.addf %61, %75 : vector<2x256xf32>
    %c16_i32_20 = arith.constant 16 : i32
    %77 = tpu.dynamic_rotate %7 by %c16_i32_20 dim 1 : vector<2x256xf32>, i32 -> vector<2x256xf32>
    %78 = vector.broadcast %0 : vector<1x256xf32> to vector<2x256xf32>
    %79 = arith.mulf %77, %78 : vector<2x256xf32>
    %c10 = arith.constant 10 : index
    %80 = memref.load %arg3[%c10] : memref<81xf32, #tpu.memory_space<smem>>
    %81 = vector.broadcast %80 : f32 to vector<2x256xf32>
    %82 = arith.mulf %81, %79 : vector<2x256xf32>
    %83 = arith.addf %68, %82 : vector<2x256xf32>
    %c37 = arith.constant 37 : index
    %84 = memref.load %arg3[%c37] : memref<81xf32, #tpu.memory_space<smem>>
    %85 = vector.broadcast %84 : f32 to vector<2x256xf32>
    %86 = arith.mulf %85, %79 : vector<2x256xf32>
    %87 = arith.addf %72, %86 : vector<2x256xf32>
    %c64 = arith.constant 64 : index
    %88 = memref.load %arg3[%c64] : memref<81xf32, #tpu.memory_space<smem>>
    %89 = vector.broadcast %88 : f32 to vector<2x256xf32>
    %90 = arith.mulf %89, %79 : vector<2x256xf32>
    %91 = arith.addf %76, %90 : vector<2x256xf32>
    %c16_i32_21 = arith.constant 16 : i32
    %92 = tpu.dynamic_rotate %9 by %c16_i32_21 dim 1 : vector<2x256xf32>, i32 -> vector<2x256xf32>
    %93 = vector.broadcast %0 : vector<1x256xf32> to vector<2x256xf32>
    %94 = arith.mulf %92, %93 : vector<2x256xf32>
    %c19 = arith.constant 19 : index
    %95 = memref.load %arg3[%c19] : memref<81xf32, #tpu.memory_space<smem>>
    %96 = vector.broadcast %95 : f32 to vector<2x256xf32>
    %97 = arith.mulf %96, %94 : vector<2x256xf32>
    %98 = arith.addf %83, %97 : vector<2x256xf32>
    %c46 = arith.constant 46 : index
    %99 = memref.load %arg3[%c46] : memref<81xf32, #tpu.memory_space<smem>>
    %100 = vector.broadcast %99 : f32 to vector<2x256xf32>
    %101 = arith.mulf %100, %94 : vector<2x256xf32>
    %102 = arith.addf %87, %101 : vector<2x256xf32>
    %c73 = arith.constant 73 : index
    %103 = memref.load %arg3[%c73] : memref<81xf32, #tpu.memory_space<smem>>
    %104 = vector.broadcast %103 : f32 to vector<2x256xf32>
    %105 = arith.mulf %104, %94 : vector<2x256xf32>
    %106 = arith.addf %91, %105 : vector<2x256xf32>
    %107 = arith.mulf %0, %3 : vector<1x256xf32>
    %c15_i32 = arith.constant 15 : i32
    %108 = tpu.dynamic_rotate %5 by %c15_i32 dim 1 : vector<2x256xf32>, i32 -> vector<2x256xf32>
    %109 = vector.broadcast %107 : vector<1x256xf32> to vector<2x256xf32>
    %110 = arith.mulf %108, %109 : vector<2x256xf32>
    %c2_22 = arith.constant 2 : index
    %111 = memref.load %arg3[%c2_22] : memref<81xf32, #tpu.memory_space<smem>>
    %112 = vector.broadcast %111 : f32 to vector<2x256xf32>
    %113 = arith.mulf %112, %110 : vector<2x256xf32>
    %114 = arith.addf %98, %113 : vector<2x256xf32>
    %c29 = arith.constant 29 : index
    %115 = memref.load %arg3[%c29] : memref<81xf32, #tpu.memory_space<smem>>
    %116 = vector.broadcast %115 : f32 to vector<2x256xf32>
    %117 = arith.mulf %116, %110 : vector<2x256xf32>
    %118 = arith.addf %102, %117 : vector<2x256xf32>
    %c56 = arith.constant 56 : index
    %119 = memref.load %arg3[%c56] : memref<81xf32, #tpu.memory_space<smem>>
    %120 = vector.broadcast %119 : f32 to vector<2x256xf32>
    %121 = arith.mulf %120, %110 : vector<2x256xf32>
    %122 = arith.addf %106, %121 : vector<2x256xf32>
    %c15_i32_23 = arith.constant 15 : i32
    %123 = tpu.dynamic_rotate %7 by %c15_i32_23 dim 1 : vector<2x256xf32>, i32 -> vector<2x256xf32>
    %124 = vector.broadcast %107 : vector<1x256xf32> to vector<2x256xf32>
    %125 = arith.mulf %123, %124 : vector<2x256xf32>
    %c11 = arith.constant 11 : index
    %126 = memref.load %arg3[%c11] : memref<81xf32, #tpu.memory_space<smem>>
    %127 = vector.broadcast %126 : f32 to vector<2x256xf32>
    %128 = arith.mulf %127, %125 : vector<2x256xf32>
    %129 = arith.addf %114, %128 : vector<2x256xf32>
    %c38 = arith.constant 38 : index
    %130 = memref.load %arg3[%c38] : memref<81xf32, #tpu.memory_space<smem>>
    %131 = vector.broadcast %130 : f32 to vector<2x256xf32>
    %132 = arith.mulf %131, %125 : vector<2x256xf32>
    %133 = arith.addf %118, %132 : vector<2x256xf32>
    %c65 = arith.constant 65 : index
    %134 = memref.load %arg3[%c65] : memref<81xf32, #tpu.memory_space<smem>>
    %135 = vector.broadcast %134 : f32 to vector<2x256xf32>
    %136 = arith.mulf %135, %125 : vector<2x256xf32>
    %137 = arith.addf %122, %136 : vector<2x256xf32>
    %c15_i32_24 = arith.constant 15 : i32
    %138 = tpu.dynamic_rotate %9 by %c15_i32_24 dim 1 : vector<2x256xf32>, i32 -> vector<2x256xf32>
    %139 = vector.broadcast %107 : vector<1x256xf32> to vector<2x256xf32>
    %140 = arith.mulf %138, %139 : vector<2x256xf32>
    %c20 = arith.constant 20 : index
    %141 = memref.load %arg3[%c20] : memref<81xf32, #tpu.memory_space<smem>>
    %142 = vector.broadcast %141 : f32 to vector<2x256xf32>
    %143 = arith.mulf %142, %140 : vector<2x256xf32>
    %144 = arith.addf %129, %143 : vector<2x256xf32>
    %c47 = arith.constant 47 : index
    %145 = memref.load %arg3[%c47] : memref<81xf32, #tpu.memory_space<smem>>
    %146 = vector.broadcast %145 : f32 to vector<2x256xf32>
    %147 = arith.mulf %146, %140 : vector<2x256xf32>
    %148 = arith.addf %133, %147 : vector<2x256xf32>
    %c74 = arith.constant 74 : index
    %149 = memref.load %arg3[%c74] : memref<81xf32, #tpu.memory_space<smem>>
    %150 = vector.broadcast %149 : f32 to vector<2x256xf32>
    %151 = arith.mulf %150, %140 : vector<2x256xf32>
    %152 = arith.addf %137, %151 : vector<2x256xf32>
    %c1_i32 = arith.constant 1 : i32
    %153 = tpu.dynamic_rotate %5 by %c1_i32 dim 1 : vector<2x256xf32>, i32 -> vector<2x256xf32>
    %154 = vector.broadcast %2 : vector<1x256xf32> to vector<2x256xf32>
    %155 = arith.mulf %153, %154 : vector<2x256xf32>
    %c3_25 = arith.constant 3 : index
    %156 = memref.load %arg3[%c3_25] : memref<81xf32, #tpu.memory_space<smem>>
    %157 = vector.broadcast %156 : f32 to vector<2x256xf32>
    %158 = arith.mulf %157, %155 : vector<2x256xf32>
    %159 = arith.addf %144, %158 : vector<2x256xf32>
    %c30 = arith.constant 30 : index
    %160 = memref.load %arg3[%c30] : memref<81xf32, #tpu.memory_space<smem>>
    %161 = vector.broadcast %160 : f32 to vector<2x256xf32>
    %162 = arith.mulf %161, %155 : vector<2x256xf32>
    %163 = arith.addf %148, %162 : vector<2x256xf32>
    %c57 = arith.constant 57 : index
    %164 = memref.load %arg3[%c57] : memref<81xf32, #tpu.memory_space<smem>>
    %165 = vector.broadcast %164 : f32 to vector<2x256xf32>
    %166 = arith.mulf %165, %155 : vector<2x256xf32>
    %167 = arith.addf %152, %166 : vector<2x256xf32>
    %c1_i32_26 = arith.constant 1 : i32
    %168 = tpu.dynamic_rotate %7 by %c1_i32_26 dim 1 : vector<2x256xf32>, i32 -> vector<2x256xf32>
    %169 = vector.broadcast %2 : vector<1x256xf32> to vector<2x256xf32>
    %170 = arith.mulf %168, %169 : vector<2x256xf32>
    %c12 = arith.constant 12 : index
    %171 = memref.load %arg3[%c12] : memref<81xf32, #tpu.memory_space<smem>>
    %172 = vector.broadcast %171 : f32 to vector<2x256xf32>
    %173 = arith.mulf %172, %170 : vector<2x256xf32>
    %174 = arith.addf %159, %173 : vector<2x256xf32>
    %c39 = arith.constant 39 : index
    %175 = memref.load %arg3[%c39] : memref<81xf32, #tpu.memory_space<smem>>
    %176 = vector.broadcast %175 : f32 to vector<2x256xf32>
    %177 = arith.mulf %176, %170 : vector<2x256xf32>
    %178 = arith.addf %163, %177 : vector<2x256xf32>
    %c66 = arith.constant 66 : index
    %179 = memref.load %arg3[%c66] : memref<81xf32, #tpu.memory_space<smem>>
    %180 = vector.broadcast %179 : f32 to vector<2x256xf32>
    %181 = arith.mulf %180, %170 : vector<2x256xf32>
    %182 = arith.addf %167, %181 : vector<2x256xf32>
    %c1_i32_27 = arith.constant 1 : i32
    %183 = tpu.dynamic_rotate %9 by %c1_i32_27 dim 1 : vector<2x256xf32>, i32 -> vector<2x256xf32>
    %184 = vector.broadcast %2 : vector<1x256xf32> to vector<2x256xf32>
    %185 = arith.mulf %183, %184 : vector<2x256xf32>
    %c21 = arith.constant 21 : index
    %186 = memref.load %arg3[%c21] : memref<81xf32, #tpu.memory_space<smem>>
    %187 = vector.broadcast %186 : f32 to vector<2x256xf32>
    %188 = arith.mulf %187, %185 : vector<2x256xf32>
    %189 = arith.addf %174, %188 : vector<2x256xf32>
    %c48 = arith.constant 48 : index
    %190 = memref.load %arg3[%c48] : memref<81xf32, #tpu.memory_space<smem>>
    %191 = vector.broadcast %190 : f32 to vector<2x256xf32>
    %192 = arith.mulf %191, %185 : vector<2x256xf32>
    %193 = arith.addf %178, %192 : vector<2x256xf32>
    %c75 = arith.constant 75 : index
    %194 = memref.load %arg3[%c75] : memref<81xf32, #tpu.memory_space<smem>>
    %195 = vector.broadcast %194 : f32 to vector<2x256xf32>
    %196 = arith.mulf %195, %185 : vector<2x256xf32>
    %197 = arith.addf %182, %196 : vector<2x256xf32>
    %c4 = arith.constant 4 : index
    %198 = memref.load %arg3[%c4] : memref<81xf32, #tpu.memory_space<smem>>
    %199 = vector.broadcast %198 : f32 to vector<2x256xf32>
    %200 = arith.mulf %199, %5 : vector<2x256xf32>
    %201 = arith.addf %189, %200 : vector<2x256xf32>
    %c31 = arith.constant 31 : index
    %202 = memref.load %arg3[%c31] : memref<81xf32, #tpu.memory_space<smem>>
    %203 = vector.broadcast %202 : f32 to vector<2x256xf32>
    %204 = arith.mulf %203, %5 : vector<2x256xf32>
    %205 = arith.addf %193, %204 : vector<2x256xf32>
    %c58 = arith.constant 58 : index
    %206 = memref.load %arg3[%c58] : memref<81xf32, #tpu.memory_space<smem>>
    %207 = vector.broadcast %206 : f32 to vector<2x256xf32>
    %208 = arith.mulf %207, %5 : vector<2x256xf32>
    %209 = arith.addf %197, %208 : vector<2x256xf32>
    %c13 = arith.constant 13 : index
    %210 = memref.load %arg3[%c13] : memref<81xf32, #tpu.memory_space<smem>>
    %211 = vector.broadcast %210 : f32 to vector<2x256xf32>
    %212 = arith.mulf %211, %7 : vector<2x256xf32>
    %213 = arith.addf %201, %212 : vector<2x256xf32>
    %c40 = arith.constant 40 : index
    %214 = memref.load %arg3[%c40] : memref<81xf32, #tpu.memory_space<smem>>
    %215 = vector.broadcast %214 : f32 to vector<2x256xf32>
    %216 = arith.mulf %215, %7 : vector<2x256xf32>
    %217 = arith.addf %205, %216 : vector<2x256xf32>
    %c67 = arith.constant 67 : index
    %218 = memref.load %arg3[%c67] : memref<81xf32, #tpu.memory_space<smem>>
    %219 = vector.broadcast %218 : f32 to vector<2x256xf32>
    %220 = arith.mulf %219, %7 : vector<2x256xf32>
    %221 = arith.addf %209, %220 : vector<2x256xf32>
    %c22 = arith.constant 22 : index
    %222 = memref.load %arg3[%c22] : memref<81xf32, #tpu.memory_space<smem>>
    %223 = vector.broadcast %222 : f32 to vector<2x256xf32>
    %224 = arith.mulf %223, %9 : vector<2x256xf32>
    %225 = arith.addf %213, %224 : vector<2x256xf32>
    %c49 = arith.constant 49 : index
    %226 = memref.load %arg3[%c49] : memref<81xf32, #tpu.memory_space<smem>>
    %227 = vector.broadcast %226 : f32 to vector<2x256xf32>
    %228 = arith.mulf %227, %9 : vector<2x256xf32>
    %229 = arith.addf %217, %228 : vector<2x256xf32>
    %c76 = arith.constant 76 : index
    %230 = memref.load %arg3[%c76] : memref<81xf32, #tpu.memory_space<smem>>
    %231 = vector.broadcast %230 : f32 to vector<2x256xf32>
    %232 = arith.mulf %231, %9 : vector<2x256xf32>
    %233 = arith.addf %221, %232 : vector<2x256xf32>
    %c255_i32 = arith.constant 255 : i32
    %234 = tpu.dynamic_rotate %5 by %c255_i32 dim 1 : vector<2x256xf32>, i32 -> vector<2x256xf32>
    %235 = vector.broadcast %3 : vector<1x256xf32> to vector<2x256xf32>
    %236 = arith.mulf %234, %235 : vector<2x256xf32>
    %c5 = arith.constant 5 : index
    %237 = memref.load %arg3[%c5] : memref<81xf32, #tpu.memory_space<smem>>
    %238 = vector.broadcast %237 : f32 to vector<2x256xf32>
    %239 = arith.mulf %238, %236 : vector<2x256xf32>
    %240 = arith.addf %225, %239 : vector<2x256xf32>
    %c32 = arith.constant 32 : index
    %241 = memref.load %arg3[%c32] : memref<81xf32, #tpu.memory_space<smem>>
    %242 = vector.broadcast %241 : f32 to vector<2x256xf32>
    %243 = arith.mulf %242, %236 : vector<2x256xf32>
    %244 = arith.addf %229, %243 : vector<2x256xf32>
    %c59 = arith.constant 59 : index
    %245 = memref.load %arg3[%c59] : memref<81xf32, #tpu.memory_space<smem>>
    %246 = vector.broadcast %245 : f32 to vector<2x256xf32>
    %247 = arith.mulf %246, %236 : vector<2x256xf32>
    %248 = arith.addf %233, %247 : vector<2x256xf32>
    %c255_i32_28 = arith.constant 255 : i32
    %249 = tpu.dynamic_rotate %7 by %c255_i32_28 dim 1 : vector<2x256xf32>, i32 -> vector<2x256xf32>
    %250 = vector.broadcast %3 : vector<1x256xf32> to vector<2x256xf32>
    %251 = arith.mulf %249, %250 : vector<2x256xf32>
    %c14 = arith.constant 14 : index
    %252 = memref.load %arg3[%c14] : memref<81xf32, #tpu.memory_space<smem>>
    %253 = vector.broadcast %252 : f32 to vector<2x256xf32>
    %254 = arith.mulf %253, %251 : vector<2x256xf32>
    %255 = arith.addf %240, %254 : vector<2x256xf32>
    %c41 = arith.constant 41 : index
    %256 = memref.load %arg3[%c41] : memref<81xf32, #tpu.memory_space<smem>>
    %257 = vector.broadcast %256 : f32 to vector<2x256xf32>
    %258 = arith.mulf %257, %251 : vector<2x256xf32>
    %259 = arith.addf %244, %258 : vector<2x256xf32>
    %c68 = arith.constant 68 : index
    %260 = memref.load %arg3[%c68] : memref<81xf32, #tpu.memory_space<smem>>
    %261 = vector.broadcast %260 : f32 to vector<2x256xf32>
    %262 = arith.mulf %261, %251 : vector<2x256xf32>
    %263 = arith.addf %248, %262 : vector<2x256xf32>
    %c255_i32_29 = arith.constant 255 : i32
    %264 = tpu.dynamic_rotate %9 by %c255_i32_29 dim 1 : vector<2x256xf32>, i32 -> vector<2x256xf32>
    %265 = vector.broadcast %3 : vector<1x256xf32> to vector<2x256xf32>
    %266 = arith.mulf %264, %265 : vector<2x256xf32>
    %c23 = arith.constant 23 : index
    %267 = memref.load %arg3[%c23] : memref<81xf32, #tpu.memory_space<smem>>
    %268 = vector.broadcast %267 : f32 to vector<2x256xf32>
    %269 = arith.mulf %268, %266 : vector<2x256xf32>
    %270 = arith.addf %255, %269 : vector<2x256xf32>
    %c50 = arith.constant 50 : index
    %271 = memref.load %arg3[%c50] : memref<81xf32, #tpu.memory_space<smem>>
    %272 = vector.broadcast %271 : f32 to vector<2x256xf32>
    %273 = arith.mulf %272, %266 : vector<2x256xf32>
    %274 = arith.addf %259, %273 : vector<2x256xf32>
    %c77 = arith.constant 77 : index
    %275 = memref.load %arg3[%c77] : memref<81xf32, #tpu.memory_space<smem>>
    %276 = vector.broadcast %275 : f32 to vector<2x256xf32>
    %277 = arith.mulf %276, %266 : vector<2x256xf32>
    %278 = arith.addf %263, %277 : vector<2x256xf32>
    %279 = arith.mulf %1, %2 : vector<1x256xf32>
    %c241_i32 = arith.constant 241 : i32
    %280 = tpu.dynamic_rotate %5 by %c241_i32 dim 1 : vector<2x256xf32>, i32 -> vector<2x256xf32>
    %281 = vector.broadcast %279 : vector<1x256xf32> to vector<2x256xf32>
    %282 = arith.mulf %280, %281 : vector<2x256xf32>
    %c6 = arith.constant 6 : index
    %283 = memref.load %arg3[%c6] : memref<81xf32, #tpu.memory_space<smem>>
    %284 = vector.broadcast %283 : f32 to vector<2x256xf32>
    %285 = arith.mulf %284, %282 : vector<2x256xf32>
    %286 = arith.addf %270, %285 : vector<2x256xf32>
    %c33 = arith.constant 33 : index
    %287 = memref.load %arg3[%c33] : memref<81xf32, #tpu.memory_space<smem>>
    %288 = vector.broadcast %287 : f32 to vector<2x256xf32>
    %289 = arith.mulf %288, %282 : vector<2x256xf32>
    %290 = arith.addf %274, %289 : vector<2x256xf32>
    %c60 = arith.constant 60 : index
    %291 = memref.load %arg3[%c60] : memref<81xf32, #tpu.memory_space<smem>>
    %292 = vector.broadcast %291 : f32 to vector<2x256xf32>
    %293 = arith.mulf %292, %282 : vector<2x256xf32>
    %294 = arith.addf %278, %293 : vector<2x256xf32>
    %c241_i32_30 = arith.constant 241 : i32
    %295 = tpu.dynamic_rotate %7 by %c241_i32_30 dim 1 : vector<2x256xf32>, i32 -> vector<2x256xf32>
    %296 = vector.broadcast %279 : vector<1x256xf32> to vector<2x256xf32>
    %297 = arith.mulf %295, %296 : vector<2x256xf32>
    %c15 = arith.constant 15 : index
    %298 = memref.load %arg3[%c15] : memref<81xf32, #tpu.memory_space<smem>>
    %299 = vector.broadcast %298 : f32 to vector<2x256xf32>
    %300 = arith.mulf %299, %297 : vector<2x256xf32>
    %301 = arith.addf %286, %300 : vector<2x256xf32>
    %c42 = arith.constant 42 : index
    %302 = memref.load %arg3[%c42] : memref<81xf32, #tpu.memory_space<smem>>
    %303 = vector.broadcast %302 : f32 to vector<2x256xf32>
    %304 = arith.mulf %303, %297 : vector<2x256xf32>
    %305 = arith.addf %290, %304 : vector<2x256xf32>
    %c69 = arith.constant 69 : index
    %306 = memref.load %arg3[%c69] : memref<81xf32, #tpu.memory_space<smem>>
    %307 = vector.broadcast %306 : f32 to vector<2x256xf32>
    %308 = arith.mulf %307, %297 : vector<2x256xf32>
    %309 = arith.addf %294, %308 : vector<2x256xf32>
    %c241_i32_31 = arith.constant 241 : i32
    %310 = tpu.dynamic_rotate %9 by %c241_i32_31 dim 1 : vector<2x256xf32>, i32 -> vector<2x256xf32>
    %311 = vector.broadcast %279 : vector<1x256xf32> to vector<2x256xf32>
    %312 = arith.mulf %310, %311 : vector<2x256xf32>
    %c24 = arith.constant 24 : index
    %313 = memref.load %arg3[%c24] : memref<81xf32, #tpu.memory_space<smem>>
    %314 = vector.broadcast %313 : f32 to vector<2x256xf32>
    %315 = arith.mulf %314, %312 : vector<2x256xf32>
    %316 = arith.addf %301, %315 : vector<2x256xf32>
    %c51 = arith.constant 51 : index
    %317 = memref.load %arg3[%c51] : memref<81xf32, #tpu.memory_space<smem>>
    %318 = vector.broadcast %317 : f32 to vector<2x256xf32>
    %319 = arith.mulf %318, %312 : vector<2x256xf32>
    %320 = arith.addf %305, %319 : vector<2x256xf32>
    %c78 = arith.constant 78 : index
    %321 = memref.load %arg3[%c78] : memref<81xf32, #tpu.memory_space<smem>>
    %322 = vector.broadcast %321 : f32 to vector<2x256xf32>
    %323 = arith.mulf %322, %312 : vector<2x256xf32>
    %324 = arith.addf %309, %323 : vector<2x256xf32>
    %c240_i32 = arith.constant 240 : i32
    %325 = tpu.dynamic_rotate %5 by %c240_i32 dim 1 : vector<2x256xf32>, i32 -> vector<2x256xf32>
    %326 = vector.broadcast %1 : vector<1x256xf32> to vector<2x256xf32>
    %327 = arith.mulf %325, %326 : vector<2x256xf32>
    %c7 = arith.constant 7 : index
    %328 = memref.load %arg3[%c7] : memref<81xf32, #tpu.memory_space<smem>>
    %329 = vector.broadcast %328 : f32 to vector<2x256xf32>
    %330 = arith.mulf %329, %327 : vector<2x256xf32>
    %331 = arith.addf %316, %330 : vector<2x256xf32>
    %c34 = arith.constant 34 : index
    %332 = memref.load %arg3[%c34] : memref<81xf32, #tpu.memory_space<smem>>
    %333 = vector.broadcast %332 : f32 to vector<2x256xf32>
    %334 = arith.mulf %333, %327 : vector<2x256xf32>
    %335 = arith.addf %320, %334 : vector<2x256xf32>
    %c61 = arith.constant 61 : index
    %336 = memref.load %arg3[%c61] : memref<81xf32, #tpu.memory_space<smem>>
    %337 = vector.broadcast %336 : f32 to vector<2x256xf32>
    %338 = arith.mulf %337, %327 : vector<2x256xf32>
    %339 = arith.addf %324, %338 : vector<2x256xf32>
    %c240_i32_32 = arith.constant 240 : i32
    %340 = tpu.dynamic_rotate %7 by %c240_i32_32 dim 1 : vector<2x256xf32>, i32 -> vector<2x256xf32>
    %341 = vector.broadcast %1 : vector<1x256xf32> to vector<2x256xf32>
    %342 = arith.mulf %340, %341 : vector<2x256xf32>
    %c16 = arith.constant 16 : index
    %343 = memref.load %arg3[%c16] : memref<81xf32, #tpu.memory_space<smem>>
    %344 = vector.broadcast %343 : f32 to vector<2x256xf32>
    %345 = arith.mulf %344, %342 : vector<2x256xf32>
    %346 = arith.addf %331, %345 : vector<2x256xf32>
    %c43 = arith.constant 43 : index
    %347 = memref.load %arg3[%c43] : memref<81xf32, #tpu.memory_space<smem>>
    %348 = vector.broadcast %347 : f32 to vector<2x256xf32>
    %349 = arith.mulf %348, %342 : vector<2x256xf32>
    %350 = arith.addf %335, %349 : vector<2x256xf32>
    %c70 = arith.constant 70 : index
    %351 = memref.load %arg3[%c70] : memref<81xf32, #tpu.memory_space<smem>>
    %352 = vector.broadcast %351 : f32 to vector<2x256xf32>
    %353 = arith.mulf %352, %342 : vector<2x256xf32>
    %354 = arith.addf %339, %353 : vector<2x256xf32>
    %c240_i32_33 = arith.constant 240 : i32
    %355 = tpu.dynamic_rotate %9 by %c240_i32_33 dim 1 : vector<2x256xf32>, i32 -> vector<2x256xf32>
    %356 = vector.broadcast %1 : vector<1x256xf32> to vector<2x256xf32>
    %357 = arith.mulf %355, %356 : vector<2x256xf32>
    %c25 = arith.constant 25 : index
    %358 = memref.load %arg3[%c25] : memref<81xf32, #tpu.memory_space<smem>>
    %359 = vector.broadcast %358 : f32 to vector<2x256xf32>
    %360 = arith.mulf %359, %357 : vector<2x256xf32>
    %361 = arith.addf %346, %360 : vector<2x256xf32>
    %c52 = arith.constant 52 : index
    %362 = memref.load %arg3[%c52] : memref<81xf32, #tpu.memory_space<smem>>
    %363 = vector.broadcast %362 : f32 to vector<2x256xf32>
    %364 = arith.mulf %363, %357 : vector<2x256xf32>
    %365 = arith.addf %350, %364 : vector<2x256xf32>
    %c79 = arith.constant 79 : index
    %366 = memref.load %arg3[%c79] : memref<81xf32, #tpu.memory_space<smem>>
    %367 = vector.broadcast %366 : f32 to vector<2x256xf32>
    %368 = arith.mulf %367, %357 : vector<2x256xf32>
    %369 = arith.addf %354, %368 : vector<2x256xf32>
    %370 = arith.mulf %1, %3 : vector<1x256xf32>
    %c239_i32 = arith.constant 239 : i32
    %371 = tpu.dynamic_rotate %5 by %c239_i32 dim 1 : vector<2x256xf32>, i32 -> vector<2x256xf32>
    %372 = vector.broadcast %370 : vector<1x256xf32> to vector<2x256xf32>
    %373 = arith.mulf %371, %372 : vector<2x256xf32>
    %c8 = arith.constant 8 : index
    %374 = memref.load %arg3[%c8] : memref<81xf32, #tpu.memory_space<smem>>
    %375 = vector.broadcast %374 : f32 to vector<2x256xf32>
    %376 = arith.mulf %375, %373 : vector<2x256xf32>
    %377 = arith.addf %361, %376 : vector<2x256xf32>
    %c35 = arith.constant 35 : index
    %378 = memref.load %arg3[%c35] : memref<81xf32, #tpu.memory_space<smem>>
    %379 = vector.broadcast %378 : f32 to vector<2x256xf32>
    %380 = arith.mulf %379, %373 : vector<2x256xf32>
    %381 = arith.addf %365, %380 : vector<2x256xf32>
    %c62 = arith.constant 62 : index
    %382 = memref.load %arg3[%c62] : memref<81xf32, #tpu.memory_space<smem>>
    %383 = vector.broadcast %382 : f32 to vector<2x256xf32>
    %384 = arith.mulf %383, %373 : vector<2x256xf32>
    %385 = arith.addf %369, %384 : vector<2x256xf32>
    %c239_i32_34 = arith.constant 239 : i32
    %386 = tpu.dynamic_rotate %7 by %c239_i32_34 dim 1 : vector<2x256xf32>, i32 -> vector<2x256xf32>
    %387 = vector.broadcast %370 : vector<1x256xf32> to vector<2x256xf32>
    %388 = arith.mulf %386, %387 : vector<2x256xf32>
    %c17 = arith.constant 17 : index
    %389 = memref.load %arg3[%c17] : memref<81xf32, #tpu.memory_space<smem>>
    %390 = vector.broadcast %389 : f32 to vector<2x256xf32>
    %391 = arith.mulf %390, %388 : vector<2x256xf32>
    %392 = arith.addf %377, %391 : vector<2x256xf32>
    %c44 = arith.constant 44 : index
    %393 = memref.load %arg3[%c44] : memref<81xf32, #tpu.memory_space<smem>>
    %394 = vector.broadcast %393 : f32 to vector<2x256xf32>
    %395 = arith.mulf %394, %388 : vector<2x256xf32>
    %396 = arith.addf %381, %395 : vector<2x256xf32>
    %c71 = arith.constant 71 : index
    %397 = memref.load %arg3[%c71] : memref<81xf32, #tpu.memory_space<smem>>
    %398 = vector.broadcast %397 : f32 to vector<2x256xf32>
    %399 = arith.mulf %398, %388 : vector<2x256xf32>
    %400 = arith.addf %385, %399 : vector<2x256xf32>
    %c239_i32_35 = arith.constant 239 : i32
    %401 = tpu.dynamic_rotate %9 by %c239_i32_35 dim 1 : vector<2x256xf32>, i32 -> vector<2x256xf32>
    %402 = vector.broadcast %370 : vector<1x256xf32> to vector<2x256xf32>
    %403 = arith.mulf %401, %402 : vector<2x256xf32>
    %c26 = arith.constant 26 : index
    %404 = memref.load %arg3[%c26] : memref<81xf32, #tpu.memory_space<smem>>
    %405 = vector.broadcast %404 : f32 to vector<2x256xf32>
    %406 = arith.mulf %405, %403 : vector<2x256xf32>
    %407 = arith.addf %392, %406 : vector<2x256xf32>
    %c53 = arith.constant 53 : index
    %408 = memref.load %arg3[%c53] : memref<81xf32, #tpu.memory_space<smem>>
    %409 = vector.broadcast %408 : f32 to vector<2x256xf32>
    %410 = arith.mulf %409, %403 : vector<2x256xf32>
    %411 = arith.addf %396, %410 : vector<2x256xf32>
    %c80 = arith.constant 80 : index
    %412 = memref.load %arg3[%c80] : memref<81xf32, #tpu.memory_space<smem>>
    %413 = vector.broadcast %412 : f32 to vector<2x256xf32>
    %414 = arith.mulf %413, %403 : vector<2x256xf32>
    %415 = arith.addf %400, %414 : vector<2x256xf32>
    %416 = arith.addf %407, %411 : vector<2x256xf32>
    %417 = arith.addf %416, %415 : vector<2x256xf32>
    %cst = arith.constant 0.333333343 : f32
    %418 = vector.broadcast %cst : f32 to vector<2x256xf32>
    %419 = arith.mulf %417, %418 : vector<2x256xf32>
    %420 = arith.subf %407, %419 : vector<2x256xf32>
    %421 = arith.subf %411, %419 : vector<2x256xf32>
    %422 = arith.subf %415, %419 : vector<2x256xf32>
    %423 = arith.mulf %420, %420 : vector<2x256xf32>
    %424 = arith.mulf %421, %421 : vector<2x256xf32>
    %425 = arith.addf %423, %424 : vector<2x256xf32>
    %426 = arith.mulf %422, %422 : vector<2x256xf32>
    %427 = arith.addf %425, %426 : vector<2x256xf32>
    %cst_36 = arith.constant 0.333333343 : f32
    %428 = vector.broadcast %cst_36 : f32 to vector<2x256xf32>
    %429 = arith.mulf %427, %428 : vector<2x256xf32>
    %cst_37 = arith.constant 9.99999974E-6 : f32
    %430 = vector.broadcast %cst_37 : f32 to vector<2x256xf32>
    %431 = arith.addf %429, %430 : vector<2x256xf32>
    %432 = math.rsqrt %431 : vector<2x256xf32>
    %c0_38 = arith.constant 0 : index
    %433 = memref.load %arg5[%c0_38] : memref<3xf32, #tpu.memory_space<smem>>
    %434 = vector.broadcast %433 : f32 to vector<2x256xf32>
    %435 = arith.mulf %432, %434 : vector<2x256xf32>
    %436 = arith.mulf %420, %435 : vector<2x256xf32>
    %c0_39 = arith.constant 0 : index
    %437 = memref.load %arg6[%c0_39] : memref<3xf32, #tpu.memory_space<smem>>
    %438 = vector.broadcast %437 : f32 to vector<2x256xf32>
    %439 = arith.addf %436, %438 : vector<2x256xf32>
    %cst_40 = arith.constant 0.000000e+00 : f32
    %440 = vector.broadcast %cst_40 : f32 to vector<2x256xf32>
    %441 = arith.maximumf %439, %440 : vector<2x256xf32>
    %c0_41 = arith.constant 0 : index
    %c0_42 = arith.constant 0 : index
    %c0_43 = arith.constant 0 : index
    %442 = vector.load %arg7[%c0_41, %c0_42, %c0_43] : memref<3x2x256xf32, #tpu.memory_space<vmem>>, vector<1x2x256xf32>
    %443 = vector.shape_cast %442 : vector<1x2x256xf32> to vector<2x256xf32>
    %444 = vector.shape_cast %441 : vector<2x256xf32> to vector<1x2x256xf32>
    tpu.vector_store %arg7[%c0_41, %c0_42, %c0_43], %444 {strides = array<i32>} : memref<3x2x256xf32, #tpu.memory_space<vmem>>, vector<1x2x256xf32>,
    %c1_44 = arith.constant 1 : index
    %445 = memref.load %arg5[%c1_44] : memref<3xf32, #tpu.memory_space<smem>>
    %446 = vector.broadcast %445 : f32 to vector<2x256xf32>
    %447 = arith.mulf %432, %446 : vector<2x256xf32>
    %448 = arith.mulf %421, %447 : vector<2x256xf32>
    %c1_45 = arith.constant 1 : index
    %449 = memref.load %arg6[%c1_45] : memref<3xf32, #tpu.memory_space<smem>>
    %450 = vector.broadcast %449 : f32 to vector<2x256xf32>
    %451 = arith.addf %448, %450 : vector<2x256xf32>
    %cst_46 = arith.constant 0.000000e+00 : f32
    %452 = vector.broadcast %cst_46 : f32 to vector<2x256xf32>
    %453 = arith.maximumf %451, %452 : vector<2x256xf32>
    %c1_47 = arith.constant 1 : index
    %c0_48 = arith.constant 0 : index
    %c0_49 = arith.constant 0 : index
    %454 = vector.load %arg7[%c1_47, %c0_48, %c0_49] : memref<3x2x256xf32, #tpu.memory_space<vmem>>, vector<1x2x256xf32>
    %455 = vector.shape_cast %454 : vector<1x2x256xf32> to vector<2x256xf32>
    %456 = vector.shape_cast %453 : vector<2x256xf32> to vector<1x2x256xf32>
    tpu.vector_store %arg7[%c1_47, %c0_48, %c0_49], %456 {strides = array<i32>} : memref<3x2x256xf32, #tpu.memory_space<vmem>>, vector<1x2x256xf32>,
    %c2_50 = arith.constant 2 : index
    %457 = memref.load %arg5[%c2_50] : memref<3xf32, #tpu.memory_space<smem>>
    %458 = vector.broadcast %457 : f32 to vector<2x256xf32>
    %459 = arith.mulf %432, %458 : vector<2x256xf32>
    %460 = arith.mulf %422, %459 : vector<2x256xf32>
    %c2_51 = arith.constant 2 : index
    %461 = memref.load %arg6[%c2_51] : memref<3xf32, #tpu.memory_space<smem>>
    %462 = vector.broadcast %461 : f32 to vector<2x256xf32>
    %463 = arith.addf %460, %462 : vector<2x256xf32>
    %cst_52 = arith.constant 0.000000e+00 : f32
    %464 = vector.broadcast %cst_52 : f32 to vector<2x256xf32>
    %465 = arith.maximumf %463, %464 : vector<2x256xf32>
    %c2_53 = arith.constant 2 : index
    %c0_54 = arith.constant 0 : index
    %c0_55 = arith.constant 0 : index
    %466 = vector.load %arg7[%c2_53, %c0_54, %c0_55] : memref<3x2x256xf32, #tpu.memory_space<vmem>>, vector<1x2x256xf32>
    %467 = vector.shape_cast %466 : vector<1x2x256xf32> to vector<2x256xf32>
    %468 = vector.shape_cast %465 : vector<2x256xf32> to vector<1x2x256xf32>
    tpu.vector_store %arg7[%c2_53, %c0_54, %c0_55], %468 {strides = array<i32>} : memref<3x2x256xf32, #tpu.memory_space<vmem>>, vector<1x2x256xf32>,
    return
  }
  func.func @transform_0(%arg0: i32) -> (i32, i32, i32) {
    %c0_i32 = arith.constant 0 : i32
    %c0_i32_0 = arith.constant 0 : i32
    %c0_i32_1 = arith.constant 0 : i32
    return %c0_i32, %arg0, %c0_i32_0 : i32, i32, i32
  }
  func.func @transform_1(%arg0: i32) -> (i32, i32) {
    %c0_i32 = arith.constant 0 : i32
    %c0_i32_0 = arith.constant 0 : i32
    %c0_i32_1 = arith.constant 0 : i32
    return %c0_i32, %c0_i32_0 : i32, i32
  }
  func.func @transform_2(%arg0: i32) -> i32 {
    %c0_i32 = arith.constant 0 : i32
    %c0_i32_0 = arith.constant 0 : i32
    return %c0_i32 : i32
  }
  func.func @transform_3(%arg0: i32) -> i32 {
    %c0_i32 = arith.constant 0 : i32
    %c0_i32_0 = arith.constant 0 : i32
    return %c0_i32 : i32
  }
  func.func @transform_4(%arg0: i32) -> i32 {
    %c0_i32 = arith.constant 0 : i32
    %c0_i32_0 = arith.constant 0 : i32
    return %c0_i32 : i32
  }
  func.func @transform_5(%arg0: i32) -> i32 {
    %c0_i32 = arith.constant 0 : i32
    %c0_i32_0 = arith.constant 0 : i32
    return %c0_i32 : i32
  }
  func.func @transform_6(%arg0: i32) -> (i32, i32, i32) {
    %c0_i32 = arith.constant 0 : i32
    %c0_i32_0 = arith.constant 0 : i32
    %c0_i32_1 = arith.constant 0 : i32
    return %c0_i32, %arg0, %c0_i32_0 : i32, i32, i32
  }
}

</mosaic_0001>

<llo_original>
// kernel: layernorm_model_forward.1
$region0: #{layernorm_model_forward.1}
  #allocation0 [shape = 'u32[]', space=smem, size = 0x4, offset = 0x4, fixed_abs, tag = 'smem constant byte address 0x4 - core index']
  #allocation1 [shape = 'u32[144,128]{1,0:T(1,128)}', space=vmem, size = 0x12000, scoped, tag = 'internal scratch']
  %s0 = inlined_call_operand.vmem [shape: f32[3,2,256], index: 0, kind: input, shape index: {}]
  %s1 = inlined_call_operand.vmem [shape: f32[4,256], index: 1, kind: input, shape index: {}]
  %s2 = inlined_call_operand.vmem [shape: f32[81], index: 2, kind: input, shape index: {}]
  %s3 = inlined_call_operand.vmem [shape: f32[3], index: 3, kind: input, shape index: {}]
  %s4 = inlined_call_operand.vmem [shape: f32[3], index: 4, kind: input, shape index: {}]
  %s5 = inlined_call_operand.vmem [shape: f32[3], index: 5, kind: input, shape index: {}]
  %s6 = inlined_call_operand.hbm [shape: f32[3,2,256], index: 6, kind: output, shape index: {}]
  %s7 = sld [smem:[#allocation0]]
  $region50: #{layernorm_model_forward.1} parent=0
    _
  %s9 = ssub.s32 1, %s7
  %s10 = scalar_select 0, %s9, %s7
  $region1: #{layernorm_model_forward.1} parent=0
    #allocation2 [shape = 'u8[512]{0}', space=smem, size = 0x200, scoped, tag = 'input window, operand 2, single buffered']
    #allocation3 [shape = 's32[1]{0}', space=sflag, size = 0x4, scoped, tag = 'scoped memory for layernorm_model_forward.1']
    #allocation4 [shape = 's32[1]{0}', space=sflag, size = 0x4, scoped, tag = 'scoped memory for layernorm_model_forward.1']
    #allocation5 [shape = 'u8[512]{0}', space=smem, size = 0x200, scoped, tag = 'input window, operand 3, single buffered']
    #allocation6 [shape = 's32[1]{0}', space=sflag, size = 0x4, scoped, tag = 'scoped memory for layernorm_model_forward.1']
    #allocation7 [shape = 'u8[512]{0}', space=smem, size = 0x200, scoped, tag = 'input window, operand 4, single buffered']
    #allocation8 [shape = 'u8[512]{0}', space=smem, size = 0x200, scoped, tag = 'input window, operand 5, single buffered']
    #allocation9 [shape = 's32[1]{0}', space=sflag, size = 0x4, scoped, tag = 'scoped memory for layernorm_model_forward.1']
    #allocation10 [shape = 'u8[6144]{0}', space=vmem, size = 0x1800, scoped, tag = 'output window, operand 0, single buffered']
    %11 = vsyncpa [#allocation4], 0
    %12 = vsyncpa [#allocation6], 0
    %13 = vsyncpa [#allocation9], 0
    %14 = vsyncpa [#allocation3], 0
    // Predicated region
    $region2: #{layernorm_model_forward.1} parent=1 // pred_check
      _
    $region3: #{layernorm_model_forward.1} parent=1 // pred_check_branch
      %16 = sbr.rel (0) target = $region5
    $region4: #{layernorm_model_forward.1} parent=1 // pred_region
      _
    $region5: #{layernorm_model_forward.1} parent=1 // pred_fallthru
      _
    // Predicated region
    $region6: #{layernorm_model_forward.1} parent=1 // pred_check
      _
    $region7: #{layernorm_model_forward.1} parent=1 // pred_check_branch
      %18 = sbr.rel (0) target = $region9
    $region8: #{layernorm_model_forward.1} parent=1 // pred_region
      _
    $region9: #{layernorm_model_forward.1} parent=1 // pred_fallthru
      _
    // Predicated region
    $region10: #{layernorm_model_forward.1} parent=1 // pred_check
      _
    $region11: #{layernorm_model_forward.1} parent=1 // pred_check_branch
      %20 = sbr.rel (0) target = $region13
    $region12: #{layernorm_model_forward.1} parent=1 // pred_region
      %s22 = ssub.s32 16, 16
      %23 = vsyncadd [#allocation4], %s22
      %s25 = sshll.u32 %s2, 4
      %s26 = int_to_ptr.vmem [resolvable:$true] %s25
      %28 = dma.vmem_to_smem %s26, 16, [#allocation2], [#allocation4]
    $region13: #{layernorm_model_forward.1} parent=1 // pred_fallthru
      _
    // Predicated region
    $region14: #{layernorm_model_forward.1} parent=1 // pred_check
      _
    $region15: #{layernorm_model_forward.1} parent=1 // pred_check_branch
      %30 = sbr.rel (0) target = $region17
    $region16: #{layernorm_model_forward.1} parent=1 // pred_region
      %s32 = ssub.s32 16, 16
      %33 = vsyncadd [#allocation6], %s32
      %s35 = sshll.u32 %s3, 4
      %s36 = int_to_ptr.vmem [resolvable:$true] %s35
      %38 = dma.vmem_to_smem %s36, 16, [#allocation5], [#allocation6]
    $region17: #{layernorm_model_forward.1} parent=1 // pred_fallthru
      _
    // Predicated region
    $region18: #{layernorm_model_forward.1} parent=1 // pred_check
      _
    $region19: #{layernorm_model_forward.1} parent=1 // pred_check_branch
      %40 = sbr.rel (0) target = $region21
    $region20: #{layernorm_model_forward.1} parent=1 // pred_region
      %s42 = ssub.s32 16, 16
      %43 = vsyncadd [#allocation6], %s42
      %s45 = sshll.u32 %s4, 4
      %s46 = int_to_ptr.vmem [resolvable:$true] %s45
      %48 = dma.vmem_to_smem %s46, 16, [#allocation7], [#allocation6]
    $region21: #{layernorm_model_forward.1} parent=1 // pred_fallthru
      _
    // Predicated region
    $region22: #{layernorm_model_forward.1} parent=1 // pred_check
      _
    $region23: #{layernorm_model_forward.1} parent=1 // pred_check_branch
      %50 = sbr.rel (0) target = $region25
    $region24: #{layernorm_model_forward.1} parent=1 // pred_region
      %s52 = ssub.s32 16, 16
      %53 = vsyncadd [#allocation9], %s52
      %s55 = sshll.u32 %s5, 4
      %s56 = int_to_ptr.vmem [resolvable:$true] %s55
      %58 = dma.vmem_to_smem %s56, 16, [#allocation8], [#allocation9]
    $region25: #{layernorm_model_forward.1} parent=1 // pred_fallthru
      _
    // Predicated region
    $region26: #{layernorm_model_forward.1} parent=1 // pred_check
      _
    $region27: #{layernorm_model_forward.1} parent=1 // pred_check_branch
      %60 = sbr.rel (0) target = $region29
    $region28: #{layernorm_model_forward.1} parent=1 // pred_region
      %61 = dma.done [#allocation4], 16
    $region29: #{layernorm_model_forward.1} parent=1 // pred_fallthru
      _
    // Predicated region
    $region30: #{layernorm_model_forward.1} parent=1 // pred_check
      _
    $region31: #{layernorm_model_forward.1} parent=1 // pred_check_branch
      %63 = sbr.rel (0) target = $region33
    $region32: #{layernorm_model_forward.1} parent=1 // pred_region
      %64 = dma.done [#allocation6], 16
    $region33: #{layernorm_model_forward.1} parent=1 // pred_fallthru
      _
    // Predicated region
    $region34: #{layernorm_model_forward.1} parent=1 // pred_check
      _
    $region35: #{layernorm_model_forward.1} parent=1 // pred_check_branch
      %66 = sbr.rel (0) target = $region37
    $region36: #{layernorm_model_forward.1} parent=1 // pred_region
      %67 = dma.done [#allocation6], 16
    $region37: #{layernorm_model_forward.1} parent=1 // pred_fallthru
      _
    // Predicated region
    $region38: #{layernorm_model_forward.1} parent=1 // pred_check
      _
    $region39: #{layernorm_model_forward.1} parent=1 // pred_check_branch
      %69 = sbr.rel (0) target = $region41
    $region40: #{layernorm_model_forward.1} parent=1 // pred_region
      %70 = dma.done [#allocation9], 16
    $region41: #{layernorm_model_forward.1} parent=1 // pred_fallthru
      _
    %71 = sfence
    %v72 = vld [vmem:[%s1] ss:$4 sm:$0x3]
    %s73 = scalar_lea.vmem %s1, 1
    %v74 = vld [vmem:[%s73] ss:$4 sm:$0x3]
    %s75 = scalar_lea.vmem %s1, 2
    %v76 = vld [vmem:[%s75] ss:$4 sm:$0x3]
    %s77 = scalar_lea.vmem %s1, 3
    %v78 = vld [vmem:[%s77] ss:$4 sm:$0x3]
    %v79 = vld [vmem:[%s0] sm:$0xf]
    %s80 = scalar_lea.vmem %s0, 4
    %v81 = vld [vmem:[%s80] sm:$0xf]
    %s82 = scalar_lea.vmem %s0, 8
    %v83 = vld [vmem:[%s82] sm:$0xf]
    %s84 = sld [smem:[#allocation5]]
    %v85 = vstv %s84
    %s86 = sld [smem:[#allocation5 + $0x1]]
    %v87 = vstv %s86
    %s88 = sld [smem:[#allocation5 + $0x2]]
    %v89 = vstv %s88
    %v90 = vmul.f32 %v72, %v76
    %v93 = vunpack.c.l.s4 1983009808
    %v94 = vunpack.c.0.s8 %v93
    %v95 = vlaneseq
    %v96 = vshrl.u32 %v95, 7
    %v97 = vsub.s32 %v94, %v96
    %v98 = vrot.slane %v79, %v97
    %v99 = vcombine.high %v98, %v98
    %102 = vrot.lane.b32.xlu0 %v98, 17
    %v103 = vpop.permute.xlu0 %102
    %104 = vrot.lane.b32.xlu0 %v99, 17
    %v105 = vpop.permute.xlu0 %104
    %v106 = vlaneseq
    %v107 = vand.u32 %v106, 127
    %vm108 = vcmp.lt.s32.totalorder %v107, 17
    %v109 = vsel %vm108, %v103, %v105
    %v110 = vsel %vm108, %v105, %v103
    %v112 = vlaneseq
    %v113 = vshrl.u32 %v112, 7
    %v114 = vsub.s32 0, %v113
    %v115 = vrot.slane %v90, %v114
    %v116 = vlaneseq
    %v117 = vshrl.u32 %v116, 7
    %v118 = vsub.s32 1, %v117
    %v119 = vrot.slane %v90, %v118
    %v122 = vmul.f32 %v110, %v115
    %v123 = vmul.f32 %v109, %v119
    %s124 = sld [smem:[#allocation2]]
    %v125 = vstv %s124
    %v126 = vmul.f32 %v125, %v122
    %v127 = vmul.f32 %v125, %v123
    %v128 = vadd.f32 %v85, %v126
    %v129 = vadd.f32 %v85, %v127
    %s130 = sld [smem:[#allocation2 + $0x1b]]
    %v131 = vstv %s130
    %v132 = vmul.f32 %v131, %v122
    %v133 = vmul.f32 %v131, %v123
    %v134 = vadd.f32 %v87, %v132
    %v135 = vadd.f32 %v87, %v133
    %s136 = sld [smem:[#allocation2 + $0x36]]
    %v137 = vstv %s136
    %v138 = vmul.f32 %v137, %v122
    %v139 = vmul.f32 %v137, %v123
    %v140 = vadd.f32 %v89, %v138
    %v141 = vadd.f32 %v89, %v139
    %v144 = vunpack.c.l.s4 1983009808
    %v145 = vunpack.c.0.s8 %v144
    %v146 = vlaneseq
    %v147 = vshrl.u32 %v146, 7
    %v148 = vsub.s32 %v145, %v147
    %v149 = vrot.slane %v81, %v148
    %v150 = vcombine.high %v149, %v149
    %153 = vrot.lane.b32.xlu0 %v149, 17
    %v154 = vpop.permute.xlu0 %153
    %155 = vrot.lane.b32.xlu0 %v150, 17
    %v156 = vpop.permute.xlu0 %155
    %v157 = vsel %vm108, %v154, %v156
    %v158 = vsel %vm108, %v156, %v154
    %v159 = vmul.f32 %v158, %v115
    %v160 = vmul.f32 %v157, %v119
    %s161 = sld [smem:[#allocation2 + $0x9]]
    %v162 = vstv %s161
    %v163 = vmul.f32 %v162, %v159
    %v164 = vmul.f32 %v162, %v160
    %v165 = vadd.f32 %v128, %v163
    %v166 = vadd.f32 %v129, %v164
    %s167 = sld [smem:[#allocation2 + $0x24]]
    %v168 = vstv %s167
    %v169 = vmul.f32 %v168, %v159
    %v170 = vmul.f32 %v168, %v160
    %v171 = vadd.f32 %v134, %v169
    %v172 = vadd.f32 %v135, %v170
    %s173 = sld [smem:[#allocation2 + $0x3f]]
    %v174 = vstv %s173
    %v175 = vmul.f32 %v174, %v159
    %v176 = vmul.f32 %v174, %v160
    %v177 = vadd.f32 %v140, %v175
    %v178 = vadd.f32 %v141, %v176
    %v181 = vunpack.c.l.s4 1983009808
    %v182 = vunpack.c.0.s8 %v181
    %v183 = vlaneseq
    %v184 = vshrl.u32 %v183, 7
    %v185 = vsub.s32 %v182, %v184
    %v186 = vrot.slane %v83, %v185
    %v187 = vcombine.high %v186, %v186
    %190 = vrot.lane.b32.xlu0 %v186, 17
    %v191 = vpop.permute.xlu0 %190
    %192 = vrot.lane.b32.xlu0 %v187, 17
    %v193 = vpop.permute.xlu0 %192
    %v194 = vsel %vm108, %v191, %v193
    %v195 = vsel %vm108, %v193, %v191
    %v196 = vmul.f32 %v195, %v115
    %v197 = vmul.f32 %v194, %v119
    %s198 = sld [smem:[#allocation2 + $0x12]]
    %v199 = vstv %s198
    %v200 = vmul.f32 %v199, %v196
    %v201 = vmul.f32 %v199, %v197
    %v202 = vadd.f32 %v165, %v200
    %v203 = vadd.f32 %v166, %v201
    %s204 = sld [smem:[#allocation2 + $0x2d]]
    %v205 = vstv %s204
    %v206 = vmul.f32 %v205, %v196
    %v207 = vmul.f32 %v205, %v197
    %v208 = vadd.f32 %v171, %v206
    %v209 = vadd.f32 %v172, %v207
    %s210 = sld [smem:[#allocation2 + $0x48]]
    %v211 = vstv %s210
    %v212 = vmul.f32 %v211, %v196
    %v213 = vmul.f32 %v211, %v197
    %v214 = vadd.f32 %v177, %v212
    %v215 = vadd.f32 %v178, %v213
    %216 = vrot.lane.b32.xlu0 %v98, 16
    %v217 = vpop.permute.xlu0 %216
    %218 = vrot.lane.b32.xlu0 %v99, 16
    %v219 = vpop.permute.xlu0 %218
    %vm220 = vcmp.lt.s32.totalorder %v107, 16
    %v221 = vsel %vm220, %v217, %v219
    %v222 = vsel %vm220, %v219, %v217
    %v224 = vlaneseq
    %v225 = vshrl.u32 %v224, 7
    %v226 = vsub.s32 0, %v225
    %v227 = vrot.slane %v72, %v226
    %v228 = vlaneseq
    %v229 = vshrl.u32 %v228, 7
    %v230 = vsub.s32 1, %v229
    %v231 = vrot.slane %v72, %v230
    %v234 = vmul.f32 %v222, %v227
    %v235 = vmul.f32 %v221, %v231
    %s236 = sld [smem:[#allocation2 + $0x1]]
    %v237 = vstv %s236
    %v238 = vmul.f32 %v237, %v234
    %v239 = vmul.f32 %v237, %v235
    %v240 = vadd.f32 %v202, %v238
    %v241 = vadd.f32 %v203, %v239
    %s242 = sld [smem:[#allocation2 + $0x1c]]
    %v243 = vstv %s242
    %v244 = vmul.f32 %v243, %v234
    %v245 = vmul.f32 %v243, %v235
    %v246 = vadd.f32 %v208, %v244
    %v247 = vadd.f32 %v209, %v245
    %s248 = sld [smem:[#allocation2 + $0x37]]
    %v249 = vstv %s248
    %v250 = vmul.f32 %v249, %v234
    %v251 = vmul.f32 %v249, %v235
    %v252 = vadd.f32 %v214, %v250
    %v253 = vadd.f32 %v215, %v251
    %254 = vrot.lane.b32.xlu0 %v149, 16
    %v255 = vpop.permute.xlu0 %254
    %256 = vrot.lane.b32.xlu0 %v150, 16
    %v257 = vpop.permute.xlu0 %256
    %v258 = vsel %vm220, %v255, %v257
    %v259 = vsel %vm220, %v257, %v255
    %v260 = vmul.f32 %v259, %v227
    %v261 = vmul.f32 %v258, %v231
    %s262 = sld [smem:[#allocation2 + $0xa]]
    %v263 = vstv %s262
    %v264 = vmul.f32 %v263, %v260
    %v265 = vmul.f32 %v263, %v261
    %v266 = vadd.f32 %v240, %v264
    %v267 = vadd.f32 %v241, %v265
    %s268 = sld [smem:[#allocation2 + $0x25]]
    %v269 = vstv %s268
    %v270 = vmul.f32 %v269, %v260
    %v271 = vmul.f32 %v269, %v261
    %v272 = vadd.f32 %v246, %v270
    %v273 = vadd.f32 %v247, %v271
    %s274 = sld [smem:[#allocation2 + $0x40]]
    %v275 = vstv %s274
    %v276 = vmul.f32 %v275, %v260
    %v277 = vmul.f32 %v275, %v261
    %v278 = vadd.f32 %v252, %v276
    %v279 = vadd.f32 %v253, %v277
    %280 = vrot.lane.b32.xlu0 %v186, 16
    %v281 = vpop.permute.xlu0 %280
    %282 = vrot.lane.b32.xlu0 %v187, 16
    %v283 = vpop.permute.xlu0 %282
    %v284 = vsel %vm220, %v281, %v283
    %v285 = vsel %vm220, %v283, %v281
    %v286 = vmul.f32 %v285, %v227
    %v287 = vmul.f32 %v284, %v231
    %s288 = sld [smem:[#allocation2 + $0x13]]
    %v289 = vstv %s288
    %v290 = vmul.f32 %v289, %v286
    %v291 = vmul.f32 %v289, %v287
    %v292 = vadd.f32 %v266, %v290
    %v293 = vadd.f32 %v267, %v291
    %s294 = sld [smem:[#allocation2 + $0x2e]]
    %v295 = vstv %s294
    %v296 = vmul.f32 %v295, %v286
    %v297 = vmul.f32 %v295, %v287
    %v298 = vadd.f32 %v272, %v296
    %v299 = vadd.f32 %v273, %v297
    %s300 = sld [smem:[#allocation2 + $0x49]]
    %v301 = vstv %s300
    %v302 = vmul.f32 %v301, %v286
    %v303 = vmul.f32 %v301, %v287
    %v304 = vadd.f32 %v278, %v302
    %v305 = vadd.f32 %v279, %v303
    %v306 = vmul.f32 %v72, %v78
    %307 = vrot.lane.b32.xlu0 %v98, 15
    %v308 = vpop.permute.xlu0 %307
    %309 = vrot.lane.b32.xlu0 %v99, 15
    %v310 = vpop.permute.xlu0 %309
    %vm311 = vcmp.lt.s32.totalorder %v107, 15
    %v312 = vsel %vm311, %v308, %v310
    %v313 = vsel %vm311, %v310, %v308
    %v315 = vlaneseq
    %v316 = vshrl.u32 %v315, 7
    %v317 = vsub.s32 0, %v316
    %v318 = vrot.slane %v306, %v317
    %v319 = vlaneseq
    %v320 = vshrl.u32 %v319, 7
    %v321 = vsub.s32 1, %v320
    %v322 = vrot.slane %v306, %v321
    %v325 = vmul.f32 %v313, %v318
    %v326 = vmul.f32 %v312, %v322
    %s327 = sld [smem:[#allocation2 + $0x2]]
    %v328 = vstv %s327
    %v329 = vmul.f32 %v328, %v325
    %v330 = vmul.f32 %v328, %v326
    %v331 = vadd.f32 %v292, %v329
    %v332 = vadd.f32 %v293, %v330
    %s333 = sld [smem:[#allocation2 + $0x1d]]
    %v334 = vstv %s333
    %v335 = vmul.f32 %v334, %v325
    %v336 = vmul.f32 %v334, %v326
    %v337 = vadd.f32 %v298, %v335
    %v338 = vadd.f32 %v299, %v336
    %s339 = sld [smem:[#allocation2 + $0x38]]
    %v340 = vstv %s339
    %v341 = vmul.f32 %v340, %v325
    %v342 = vmul.f32 %v340, %v326
    %v343 = vadd.f32 %v304, %v341
    %v344 = vadd.f32 %v305, %v342
    %345 = vrot.lane.b32.xlu0 %v149, 15
    %v346 = vpop.permute.xlu0 %345
    %347 = vrot.lane.b32.xlu0 %v150, 15
    %v348 = vpop.permute.xlu0 %347
    %v349 = vsel %vm311, %v346, %v348
    %v350 = vsel %vm311, %v348, %v346
    %v351 = vmul.f32 %v350, %v318
    %v352 = vmul.f32 %v349, %v322
    %s353 = sld [smem:[#allocation2 + $0xb]]
    %v354 = vstv %s353
    %v355 = vmul.f32 %v354, %v351
    %v356 = vmul.f32 %v354, %v352
    %v357 = vadd.f32 %v331, %v355
    %v358 = vadd.f32 %v332, %v356
    %s359 = sld [smem:[#allocation2 + $0x26]]
    %v360 = vstv %s359
    %v361 = vmul.f32 %v360, %v351
    %v362 = vmul.f32 %v360, %v352
    %v363 = vadd.f32 %v337, %v361
    %v364 = vadd.f32 %v338, %v362
    %s365 = sld [smem:[#allocation2 + $0x41]]
    %v366 = vstv %s365
    %v367 = vmul.f32 %v366, %v351
    %v368 = vmul.f32 %v366, %v352
    %v369 = vadd.f32 %v343, %v367
    %v370 = vadd.f32 %v344, %v368
    %371 = vrot.lane.b32.xlu0 %v186, 15
    %v372 = vpop.permute.xlu0 %371
    %373 = vrot.lane.b32.xlu0 %v187, 15
    %v374 = vpop.permute.xlu0 %373
    %v375 = vsel %vm311, %v372, %v374
    %v376 = vsel %vm311, %v374, %v372
    %v377 = vmul.f32 %v376, %v318
    %v378 = vmul.f32 %v375, %v322
    %s379 = sld [smem:[#allocation2 + $0x14]]
    %v380 = vstv %s379
    %v381 = vmul.f32 %v380, %v377
    %v382 = vmul.f32 %v380, %v378
    %v383 = vadd.f32 %v357, %v381
    %v384 = vadd.f32 %v358, %v382
    %s385 = sld [smem:[#allocation2 + $0x2f]]
    %v386 = vstv %s385
    %v387 = vmul.f32 %v386, %v377
    %v388 = vmul.f32 %v386, %v378
    %v389 = vadd.f32 %v363, %v387
    %v390 = vadd.f32 %v364, %v388
    %s391 = sld [smem:[#allocation2 + $0x4a]]
    %v392 = vstv %s391
    %v393 = vmul.f32 %v392, %v377
    %v394 = vmul.f32 %v392, %v378
    %v395 = vadd.f32 %v369, %v393
    %v396 = vadd.f32 %v370, %v394
    %397 = vrot.lane.b32.xlu0 %v98, 1
    %v398 = vpop.permute.xlu0 %397
    %399 = vrot.lane.b32.xlu0 %v99, 1
    %v400 = vpop.permute.xlu0 %399
    %vm401 = vcmp.lt.s32.totalorder %v107, 1
    %v402 = vsel %vm401, %v398, %v400
    %v403 = vsel %vm401, %v400, %v398
    %v405 = vlaneseq
    %v406 = vshrl.u32 %v405, 7
    %v407 = vsub.s32 0, %v406
    %v408 = vrot.slane %v76, %v407
    %v409 = vlaneseq
    %v410 = vshrl.u32 %v409, 7
    %v411 = vsub.s32 1, %v410
    %v412 = vrot.slane %v76, %v411
    %v415 = vmul.f32 %v403, %v408
    %v416 = vmul.f32 %v402, %v412
    %s417 = sld [smem:[#allocation2 + $0x3]]
    %v418 = vstv %s417
    %v419 = vmul.f32 %v418, %v415
    %v420 = vmul.f32 %v418, %v416
    %v421 = vadd.f32 %v383, %v419
    %v422 = vadd.f32 %v384, %v420
    %s423 = sld [smem:[#allocation2 + $0x1e]]
    %v424 = vstv %s423
    %v425 = vmul.f32 %v424, %v415
    %v426 = vmul.f32 %v424, %v416
    %v427 = vadd.f32 %v389, %v425
    %v428 = vadd.f32 %v390, %v426
    %s429 = sld [smem:[#allocation2 + $0x39]]
    %v430 = vstv %s429
    %v431 = vmul.f32 %v430, %v415
    %v432 = vmul.f32 %v430, %v416
    %v433 = vadd.f32 %v395, %v431
    %v434 = vadd.f32 %v396, %v432
    %435 = vrot.lane.b32.xlu0 %v149, 1
    %v436 = vpop.permute.xlu0 %435
    %437 = vrot.lane.b32.xlu0 %v150, 1
    %v438 = vpop.permute.xlu0 %437
    %v439 = vsel %vm401, %v436, %v438
    %v440 = vsel %vm401, %v438, %v436
    %v441 = vmul.f32 %v440, %v408
    %v442 = vmul.f32 %v439, %v412
    %s443 = sld [smem:[#allocation2 + $0xc]]
    %v444 = vstv %s443
    %v445 = vmul.f32 %v444, %v441
    %v446 = vmul.f32 %v444, %v442
    %v447 = vadd.f32 %v421, %v445
    %v448 = vadd.f32 %v422, %v446
    %s449 = sld [smem:[#allocation2 + $0x27]]
    %v450 = vstv %s449
    %v451 = vmul.f32 %v450, %v441
    %v452 = vmul.f32 %v450, %v442
    %v453 = vadd.f32 %v427, %v451
    %v454 = vadd.f32 %v428, %v452
    %s455 = sld [smem:[#allocation2 + $0x42]]
    %v456 = vstv %s455
    %v457 = vmul.f32 %v456, %v441
    %v458 = vmul.f32 %v456, %v442
    %v459 = vadd.f32 %v433, %v457
    %v460 = vadd.f32 %v434, %v458
    %461 = vrot.lane.b32.xlu0 %v186, 1
    %v462 = vpop.permute.xlu0 %461
    %463 = vrot.lane.b32.xlu0 %v187, 1
    %v464 = vpop.permute.xlu0 %463
    %v465 = vsel %vm401, %v462, %v464
    %v466 = vsel %vm401, %v464, %v462
    %v467 = vmul.f32 %v466, %v408
    %v468 = vmul.f32 %v465, %v412
    %s469 = sld [smem:[#allocation2 + $0x15]]
    %v470 = vstv %s469
    %v471 = vmul.f32 %v470, %v467
    %v472 = vmul.f32 %v470, %v468
    %v473 = vadd.f32 %v447, %v471
    %v474 = vadd.f32 %v448, %v472
    %s475 = sld [smem:[#allocation2 + $0x30]]
    %v476 = vstv %s475
    %v477 = vmul.f32 %v476, %v467
    %v478 = vmul.f32 %v476, %v468
    %v479 = vadd.f32 %v453, %v477
    %v480 = vadd.f32 %v454, %v478
    %s481 = sld [smem:[#allocation2 + $0x4b]]
    %v482 = vstv %s481
    %v483 = vmul.f32 %v482, %v467
    %v484 = vmul.f32 %v482, %v468
    %v485 = vadd.f32 %v459, %v483
    %v486 = vadd.f32 %v460, %v484
    %s487 = sld [smem:[#allocation2 + $0x4]]
    %v488 = vstv %s487
    %v489 = vmul.f32 %v488, %v79
    %v492 = vunpack.c.l.s4 1983009808
    %v493 = vunpack.c.0.s8 %v492
    %v494 = vlaneseq
    %v495 = vshrl.u32 %v494, 7
    %v496 = vsub.s32 %v493, %v495
    %v497 = vrot.slane %v489, %v496
    %v498 = vcombine.high %v497, %v497
    %v501 = vadd.f32 %v473, %v497
    %v502 = vadd.f32 %v474, %v498
    %s503 = sld [smem:[#allocation2 + $0x1f]]
    %v504 = vstv %s503
    %v505 = vmul.f32 %v504, %v79
    %v508 = vunpack.c.l.s4 1983009808
    %v509 = vunpack.c.0.s8 %v508
    %v510 = vlaneseq
    %v511 = vshrl.u32 %v510, 7
    %v512 = vsub.s32 %v509, %v511
    %v513 = vrot.slane %v505, %v512
    %v514 = vcombine.high %v513, %v513
    %v517 = vadd.f32 %v479, %v513
    %v518 = vadd.f32 %v480, %v514
    %s519 = sld [smem:[#allocation2 + $0x3a]]
    %v520 = vstv %s519
    %v521 = vmul.f32 %v520, %v79
    %v524 = vunpack.c.l.s4 1983009808
    %v525 = vunpack.c.0.s8 %v524
    %v526 = vlaneseq
    %v527 = vshrl.u32 %v526, 7
    %v528 = vsub.s32 %v525, %v527
    %v529 = vrot.slane %v521, %v528
    %v530 = vcombine.high %v529, %v529
    %v533 = vadd.f32 %v485, %v529
    %v534 = vadd.f32 %v486, %v530
    %s535 = sld [smem:[#allocation2 + $0xd]]
    %v536 = vstv %s535
    %v537 = vmul.f32 %v536, %v81
    %v540 = vunpack.c.l.s4 1983009808
    %v541 = vunpack.c.0.s8 %v540
    %v542 = vlaneseq
    %v543 = vshrl.u32 %v542, 7
    %v544 = vsub.s32 %v541, %v543
    %v545 = vrot.slane %v537, %v544
    %v546 = vcombine.high %v545, %v545
    %v549 = vadd.f32 %v501, %v545
    %v550 = vadd.f32 %v502, %v546
    %s551 = sld [smem:[#allocation2 + $0x28]]
    %v552 = vstv %s551
    %v553 = vmul.f32 %v552, %v81
    %v556 = vunpack.c.l.s4 1983009808
    %v557 = vunpack.c.0.s8 %v556
    %v558 = vlaneseq
    %v559 = vshrl.u32 %v558, 7
    %v560 = vsub.s32 %v557, %v559
    %v561 = vrot.slane %v553, %v560
    %v562 = vcombine.high %v561, %v561
    %v565 = vadd.f32 %v517, %v561
    %v566 = vadd.f32 %v518, %v562
    %s567 = sld [smem:[#allocation2 + $0x43]]
    %v568 = vstv %s567
    %v569 = vmul.f32 %v568, %v81
    %v572 = vunpack.c.l.s4 1983009808
    %v573 = vunpack.c.0.s8 %v572
    %v574 = vlaneseq
    %v575 = vshrl.u32 %v574, 7
    %v576 = vsub.s32 %v573, %v575
    %v577 = vrot.slane %v569, %v576
    %v578 = vcombine.high %v577, %v577
    %v581 = vadd.f32 %v533, %v577
    %v582 = vadd.f32 %v534, %v578
    %s583 = sld [smem:[#allocation2 + $0x16]]
    %v584 = vstv %s583
    %v585 = vmul.f32 %v584, %v83
    %v588 = vunpack.c.l.s4 1983009808
    %v589 = vunpack.c.0.s8 %v588
    %v590 = vlaneseq
    %v591 = vshrl.u32 %v590, 7
    %v592 = vsub.s32 %v589, %v591
    %v593 = vrot.slane %v585, %v592
    %v594 = vcombine.high %v593, %v593
    %v597 = vadd.f32 %v549, %v593
    %v598 = vadd.f32 %v550, %v594
    %s599 = sld [smem:[#allocation2 + $0x31]]
    %v600 = vstv %s599
    %v601 = vmul.f32 %v600, %v83
    %v604 = vunpack.c.l.s4 1983009808
    %v605 = vunpack.c.0.s8 %v604
    %v606 = vlaneseq
    %v607 = vshrl.u32 %v606, 7
    %v608 = vsub.s32 %v605, %v607
    %v609 = vrot.slane %v601, %v608
    %v610 = vcombine.high %v609, %v609
    %v613 = vadd.f32 %v565, %v609
    %v614 = vadd.f32 %v566, %v610
    %s615 = sld [smem:[#allocation2 + $0x4c]]
    %v616 = vstv %s615
    %v617 = vmul.f32 %v616, %v83
    %v620 = vunpack.c.l.s4 1983009808
    %v621 = vunpack.c.0.s8 %v620
    %v622 = vlaneseq
    %v623 = vshrl.u32 %v622, 7
    %v624 = vsub.s32 %v621, %v623
    %v625 = vrot.slane %v617, %v624
    %v626 = vcombine.high %v625, %v625
    %v629 = vadd.f32 %v581, %v625
    %v630 = vadd.f32 %v582, %v626
    %631 = vrot.lane.b32.xlu0 %v98, 127
    %v632 = vpop.permute.xlu0 %631
    %633 = vrot.lane.b32.xlu0 %v99, 127
    %v634 = vpop.permute.xlu0 %633
    %vm635 = vcmp.lt.s32.totalorder %v107, 127
    %v636 = vsel %vm635, %v632, %v634
    %v637 = vsel %vm635, %v634, %v632
    %v639 = vlaneseq
    %v640 = vshrl.u32 %v639, 7
    %v641 = vsub.s32 0, %v640
    %v642 = vrot.slane %v78, %v641
    %v643 = vlaneseq
    %v644 = vshrl.u32 %v643, 7
    %v645 = vsub.s32 1, %v644
    %v646 = vrot.slane %v78, %v645
    %v649 = vmul.f32 %v636, %v642
    %v650 = vmul.f32 %v637, %v646
    %s651 = sld [smem:[#allocation2 + $0x5]]
    %v652 = vstv %s651
    %v653 = vmul.f32 %v652, %v649
    %v654 = vmul.f32 %v652, %v650
    %v655 = vadd.f32 %v597, %v653
    %v656 = vadd.f32 %v598, %v654
    %s657 = sld [smem:[#allocation2 + $0x20]]
    %v658 = vstv %s657
    %v659 = vmul.f32 %v658, %v649
    %v660 = vmul.f32 %v658, %v650
    %v661 = vadd.f32 %v613, %v659
    %v662 = vadd.f32 %v614, %v660
    %s663 = sld [smem:[#allocation2 + $0x3b]]
    %v664 = vstv %s663
    %v665 = vmul.f32 %v664, %v649
    %v666 = vmul.f32 %v664, %v650
    %v667 = vadd.f32 %v629, %v665
    %v668 = vadd.f32 %v630, %v666
    %669 = vrot.lane.b32.xlu0 %v149, 127
    %v670 = vpop.permute.xlu0 %669
    %671 = vrot.lane.b32.xlu0 %v150, 127
    %v672 = vpop.permute.xlu0 %671
    %v673 = vsel %vm635, %v670, %v672
    %v674 = vsel %vm635, %v672, %v670
    %v675 = vmul.f32 %v673, %v642
    %v676 = vmul.f32 %v674, %v646
    %s677 = sld [smem:[#allocation2 + $0xe]]
    %v678 = vstv %s677
    %v679 = vmul.f32 %v678, %v675
    %v680 = vmul.f32 %v678, %v676
    %v681 = vadd.f32 %v655, %v679
    %v682 = vadd.f32 %v656, %v680
    %s683 = sld [smem:[#allocation2 + $0x29]]
    %v684 = vstv %s683
    %v685 = vmul.f32 %v684, %v675
    %v686 = vmul.f32 %v684, %v676
    %v687 = vadd.f32 %v661, %v685
    %v688 = vadd.f32 %v662, %v686
    %s689 = sld [smem:[#allocation2 + $0x44]]
    %v690 = vstv %s689
    %v691 = vmul.f32 %v690, %v675
    %v692 = vmul.f32 %v690, %v676
    %v693 = vadd.f32 %v667, %v691
    %v694 = vadd.f32 %v668, %v692
    %695 = vrot.lane.b32.xlu0 %v186, 127
    %v696 = vpop.permute.xlu0 %695
    %697 = vrot.lane.b32.xlu0 %v187, 127
    %v698 = vpop.permute.xlu0 %697
    %v699 = vsel %vm635, %v696, %v698
    %v700 = vsel %vm635, %v698, %v696
    %v701 = vmul.f32 %v699, %v642
    %v702 = vmul.f32 %v700, %v646
    %s703 = sld [smem:[#allocation2 + $0x17]]
    %v704 = vstv %s703
    %v705 = vmul.f32 %v704, %v701
    %v706 = vmul.f32 %v704, %v702
    %v707 = vadd.f32 %v681, %v705
    %v708 = vadd.f32 %v682, %v706
    %s709 = sld [smem:[#allocation2 + $0x32]]
    %v710 = vstv %s709
    %v711 = vmul.f32 %v710, %v701
    %v712 = vmul.f32 %v710, %v702
    %v713 = vadd.f32 %v687, %v711
    %v714 = vadd.f32 %v688, %v712
    %s715 = sld [smem:[#allocation2 + $0x4d]]
    %v716 = vstv %s715
    %v717 = vmul.f32 %v716, %v701
    %v718 = vmul.f32 %v716, %v702
    %v719 = vadd.f32 %v693, %v717
    %v720 = vadd.f32 %v694, %v718
    %v721 = vmul.f32 %v74, %v76
    %722 = vrot.lane.b32.xlu0 %v98, 113
    %v723 = vpop.permute.xlu0 %722
    %724 = vrot.lane.b32.xlu0 %v99, 113
    %v725 = vpop.permute.xlu0 %724
    %vm726 = vcmp.lt.s32.totalorder %v107, 113
    %v727 = vsel %vm726, %v723, %v725
    %v728 = vsel %vm726, %v725, %v723
    %v730 = vlaneseq
    %v731 = vshrl.u32 %v730, 7
    %v732 = vsub.s32 0, %v731
    %v733 = vrot.slane %v721, %v732
    %v734 = vlaneseq
    %v735 = vshrl.u32 %v734, 7
    %v736 = vsub.s32 1, %v735
    %v737 = vrot.slane %v721, %v736
    %v740 = vmul.f32 %v727, %v733
    %v741 = vmul.f32 %v728, %v737
    %s742 = sld [smem:[#allocation2 + $0x6]]
    %v743 = vstv %s742
    %v744 = vmul.f32 %v743, %v740
    %v745 = vmul.f32 %v743, %v741
    %v746 = vadd.f32 %v707, %v744
    %v747 = vadd.f32 %v708, %v745
    %s748 = sld [smem:[#allocation2 + $0x21]]
    %v749 = vstv %s748
    %v750 = vmul.f32 %v749, %v740
    %v751 = vmul.f32 %v749, %v741
    %v752 = vadd.f32 %v713, %v750
    %v753 = vadd.f32 %v714, %v751
    %s754 = sld [smem:[#allocation2 + $0x3c]]
    %v755 = vstv %s754
    %v756 = vmul.f32 %v755, %v740
    %v757 = vmul.f32 %v755, %v741
    %v758 = vadd.f32 %v719, %v756
    %v759 = vadd.f32 %v720, %v757
    %760 = vrot.lane.b32.xlu0 %v149, 113
    %v761 = vpop.permute.xlu0 %760
    %762 = vrot.lane.b32.xlu0 %v150, 113
    %v763 = vpop.permute.xlu0 %762
    %v764 = vsel %vm726, %v761, %v763
    %v765 = vsel %vm726, %v763, %v761
    %v766 = vmul.f32 %v764, %v733
    %v767 = vmul.f32 %v765, %v737
    %s768 = sld [smem:[#allocation2 + $0xf]]
    %v769 = vstv %s768
    %v770 = vmul.f32 %v769, %v766
    %v771 = vmul.f32 %v769, %v767
    %v772 = vadd.f32 %v746, %v770
    %v773 = vadd.f32 %v747, %v771
    %s774 = sld [smem:[#allocation2 + $0x2a]]
    %v775 = vstv %s774
    %v776 = vmul.f32 %v775, %v766
    %v777 = vmul.f32 %v775, %v767
    %v778 = vadd.f32 %v752, %v776
    %v779 = vadd.f32 %v753, %v777
    %s780 = sld [smem:[#allocation2 + $0x45]]
    %v781 = vstv %s780
    %v782 = vmul.f32 %v781, %v766
    %v783 = vmul.f32 %v781, %v767
    %v784 = vadd.f32 %v758, %v782
    %v785 = vadd.f32 %v759, %v783
    %786 = vrot.lane.b32.xlu0 %v186, 113
    %v787 = vpop.permute.xlu0 %786
    %788 = vrot.lane.b32.xlu0 %v187, 113
    %v789 = vpop.permute.xlu0 %788
    %v790 = vsel %vm726, %v787, %v789
    %v791 = vsel %vm726, %v789, %v787
    %v792 = vmul.f32 %v790, %v733
    %v793 = vmul.f32 %v791, %v737
    %s794 = sld [smem:[#allocation2 + $0x18]]
    %v795 = vstv %s794
    %v796 = vmul.f32 %v795, %v792
    %v797 = vmul.f32 %v795, %v793
    %v798 = vadd.f32 %v772, %v796
    %v799 = vadd.f32 %v773, %v797
    %s800 = sld [smem:[#allocation2 + $0x33]]
    %v801 = vstv %s800
    %v802 = vmul.f32 %v801, %v792
    %v803 = vmul.f32 %v801, %v793
    %v804 = vadd.f32 %v778, %v802
    %v805 = vadd.f32 %v779, %v803
    %s806 = sld [smem:[#allocation2 + $0x4e]]
    %v807 = vstv %s806
    %v808 = vmul.f32 %v807, %v792
    %v809 = vmul.f32 %v807, %v793
    %v810 = vadd.f32 %v784, %v808
    %v811 = vadd.f32 %v785, %v809
    %812 = vrot.lane.b32.xlu0 %v98, 112
    %v813 = vpop.permute.xlu0 %812
    %814 = vrot.lane.b32.xlu0 %v99, 112
    %v815 = vpop.permute.xlu0 %814
    %vm816 = vcmp.lt.s32.totalorder %v107, 112
    %v817 = vsel %vm816, %v813, %v815
    %v818 = vsel %vm816, %v815, %v813
    %v820 = vlaneseq
    %v821 = vshrl.u32 %v820, 7
    %v822 = vsub.s32 0, %v821
    %v823 = vrot.slane %v74, %v822
    %v824 = vlaneseq
    %v825 = vshrl.u32 %v824, 7
    %v826 = vsub.s32 1, %v825
    %v827 = vrot.slane %v74, %v826
    %v830 = vmul.f32 %v817, %v823
    %v831 = vmul.f32 %v818, %v827
    %s832 = sld [smem:[#allocation2 + $0x7]]
    %v833 = vstv %s832
    %v834 = vmul.f32 %v833, %v830
    %v835 = vmul.f32 %v833, %v831
    %v836 = vadd.f32 %v798, %v834
    %v837 = vadd.f32 %v799, %v835
    %s838 = sld [smem:[#allocation2 + $0x22]]
    %v839 = vstv %s838
    %v840 = vmul.f32 %v839, %v830
    %v841 = vmul.f32 %v839, %v831
    %v842 = vadd.f32 %v804, %v840
    %v843 = vadd.f32 %v805, %v841
    %s844 = sld [smem:[#allocation2 + $0x3d]]
    %v845 = vstv %s844
    %v846 = vmul.f32 %v845, %v830
    %v847 = vmul.f32 %v845, %v831
    %v848 = vadd.f32 %v810, %v846
    %v849 = vadd.f32 %v811, %v847
    %850 = vrot.lane.b32.xlu0 %v149, 112
    %v851 = vpop.permute.xlu0 %850
    %852 = vrot.lane.b32.xlu0 %v150, 112
    %v853 = vpop.permute.xlu0 %852
    %v854 = vsel %vm816, %v851, %v853
    %v855 = vsel %vm816, %v853, %v851
    %v856 = vmul.f32 %v854, %v823
    %v857 = vmul.f32 %v855, %v827
    %s858 = sld [smem:[#allocation2 + $0x10]]
    %v859 = vstv %s858
    %v860 = vmul.f32 %v859, %v856
    %v861 = vmul.f32 %v859, %v857
    %v862 = vadd.f32 %v836, %v860
    %v863 = vadd.f32 %v837, %v861
    %s864 = sld [smem:[#allocation2 + $0x2b]]
    %v865 = vstv %s864
    %v866 = vmul.f32 %v865, %v856
    %v867 = vmul.f32 %v865, %v857
    %v868 = vadd.f32 %v842, %v866
    %v869 = vadd.f32 %v843, %v867
    %s870 = sld [smem:[#allocation2 + $0x46]]
    %v871 = vstv %s870
    %v872 = vmul.f32 %v871, %v856
    %v873 = vmul.f32 %v871, %v857
    %v874 = vadd.f32 %v848, %v872
    %v875 = vadd.f32 %v849, %v873
    %876 = vrot.lane.b32.xlu0 %v186, 112
    %v877 = vpop.permute.xlu0 %876
    %878 = vrot.lane.b32.xlu0 %v187, 112
    %v879 = vpop.permute.xlu0 %878
    %v880 = vsel %vm816, %v877, %v879
    %v881 = vsel %vm816, %v879, %v877
    %v882 = vmul.f32 %v880, %v823
    %v883 = vmul.f32 %v881, %v827
    %s884 = sld [smem:[#allocation2 + $0x19]]
    %v885 = vstv %s884
    %v886 = vmul.f32 %v885, %v882
    %v887 = vmul.f32 %v885, %v883
    %v888 = vadd.f32 %v862, %v886
    %v889 = vadd.f32 %v863, %v887
    %s890 = sld [smem:[#allocation2 + $0x34]]
    %v891 = vstv %s890
    %v892 = vmul.f32 %v891, %v882
    %v893 = vmul.f32 %v891, %v883
    %v894 = vadd.f32 %v868, %v892
    %v895 = vadd.f32 %v869, %v893
    %s896 = sld [smem:[#allocation2 + $0x4f]]
    %v897 = vstv %s896
    %v898 = vmul.f32 %v897, %v882
    %v899 = vmul.f32 %v897, %v883
    %v900 = vadd.f32 %v874, %v898
    %v901 = vadd.f32 %v875, %v899
    %v902 = vmul.f32 %v74, %v78
    %903 = vrot.lane.b32.xlu0 %v98, 111
    %v904 = vpop.permute.xlu0 %903
    %905 = vrot.lane.b32.xlu0 %v99, 111
    %v906 = vpop.permute.xlu0 %905
    %vm907 = vcmp.lt.s32.totalorder %v107, 111
    %v908 = vsel %vm907, %v904, %v906
    %v909 = vsel %vm907, %v906, %v904
    %v911 = vlaneseq
    %v912 = vshrl.u32 %v911, 7
    %v913 = vsub.s32 0, %v912
    %v914 = vrot.slane %v902, %v913
    %v915 = vlaneseq
    %v916 = vshrl.u32 %v915, 7
    %v917 = vsub.s32 1, %v916
    %v918 = vrot.slane %v902, %v917
    %v921 = vmul.f32 %v908, %v914
    %v922 = vmul.f32 %v909, %v918
    %s923 = sld [smem:[#allocation2 + $0x8]]
    %v924 = vstv %s923
    %v925 = vmul.f32 %v924, %v921
    %v926 = vmul.f32 %v924, %v922
    %v927 = vadd.f32 %v888, %v925
    %v928 = vadd.f32 %v889, %v926
    %s929 = sld [smem:[#allocation2 + $0x23]]
    %v930 = vstv %s929
    %v931 = vmul.f32 %v930, %v921
    %v932 = vmul.f32 %v930, %v922
    %v933 = vadd.f32 %v894, %v931
    %v934 = vadd.f32 %v895, %v932
    %s935 = sld [smem:[#allocation2 + $0x3e]]
    %v936 = vstv %s935
    %v937 = vmul.f32 %v936, %v921
    %v938 = vmul.f32 %v936, %v922
    %v939 = vadd.f32 %v900, %v937
    %v940 = vadd.f32 %v901, %v938
    %941 = vrot.lane.b32.xlu0 %v149, 111
    %v942 = vpop.permute.xlu0 %941
    %943 = vrot.lane.b32.xlu0 %v150, 111
    %v944 = vpop.permute.xlu0 %943
    %v945 = vsel %vm907, %v942, %v944
    %v946 = vsel %vm907, %v944, %v942
    %v947 = vmul.f32 %v945, %v914
    %v948 = vmul.f32 %v946, %v918
    %s949 = sld [smem:[#allocation2 + $0x11]]
    %v950 = vstv %s949
    %v951 = vmul.f32 %v950, %v947
    %v952 = vmul.f32 %v950, %v948
    %v953 = vadd.f32 %v927, %v951
    %v954 = vadd.f32 %v928, %v952
    %s955 = sld [smem:[#allocation2 + $0x2c]]
    %v956 = vstv %s955
    %v957 = vmul.f32 %v956, %v947
    %v958 = vmul.f32 %v956, %v948
    %v959 = vadd.f32 %v933, %v957
    %v960 = vadd.f32 %v934, %v958
    %s961 = sld [smem:[#allocation2 + $0x47]]
    %v962 = vstv %s961
    %v963 = vmul.f32 %v962, %v947
    %v964 = vmul.f32 %v962, %v948
    %v965 = vadd.f32 %v939, %v963
    %v966 = vadd.f32 %v940, %v964
    %967 = vrot.lane.b32.xlu0 %v186, 111
    %v968 = vpop.permute.xlu0 %967
    %969 = vrot.lane.b32.xlu0 %v187, 111
    %v970 = vpop.permute.xlu0 %969
    %v971 = vsel %vm907, %v968, %v970
    %v972 = vsel %vm907, %v970, %v968
    %v973 = vmul.f32 %v971, %v914
    %v974 = vmul.f32 %v972, %v918
    %s975 = sld [smem:[#allocation2 + $0x1a]]
    %v976 = vstv %s975
    %v977 = vmul.f32 %v976, %v973
    %v978 = vmul.f32 %v976, %v974
    %v979 = vadd.f32 %v953, %v977
    %v980 = vadd.f32 %v954, %v978
    %s981 = sld [smem:[#allocation2 + $0x35]]
    %v982 = vstv %s981
    %v983 = vmul.f32 %v982, %v973
    %v984 = vmul.f32 %v982, %v974
    %v985 = vadd.f32 %v959, %v983
    %v986 = vadd.f32 %v960, %v984
    %s987 = sld [smem:[#allocation2 + $0x50]]
    %v988 = vstv %s987
    %v989 = vmul.f32 %v988, %v973
    %v990 = vmul.f32 %v988, %v974
    %v991 = vadd.f32 %v965, %v989
    %v992 = vadd.f32 %v966, %v990
    %v993 = vadd.f32 %v979, %v985
    %v994 = vadd.f32 %v980, %v986
    %v995 = vadd.f32 %v993, %v991
    %v996 = vadd.f32 %v994, %v992
    %v997 = vmul.f32 %v995, 0.33333334
    %v998 = vmul.f32 %v996, 0.33333334
    %v999 = vsub.f32 %v979, %v997
    %v1000 = vsub.f32 %v980, %v998
    %v1001 = vsub.f32 %v985, %v997
    %v1002 = vsub.f32 %v986, %v998
    %v1003 = vsub.f32 %v991, %v997
    %v1004 = vsub.f32 %v992, %v998
    %v1005 = vmul.f32 %v999, %v999
    %v1006 = vmul.f32 %v1000, %v1000
    %v1007 = vmul.f32 %v1001, %v1001
    %v1008 = vmul.f32 %v1002, %v1002
    %v1009 = vadd.f32 %v1005, %v1007
    %v1010 = vadd.f32 %v1006, %v1008
    %v1011 = vmul.f32 %v1003, %v1003
    %v1012 = vmul.f32 %v1004, %v1004
    %v1013 = vadd.f32 %v1009, %v1011
    %v1014 = vadd.f32 %v1010, %v1012
    %v1015 = vmul.f32 %v1013, 0.33333334
    %v1016 = vmul.f32 %v1014, 0.33333334
    %v1017 = vadd.f32 %v1015, 1e-05
    %v1018 = vadd.f32 %v1016, 1e-05
    %v1019 = vrsqrt.pop %v1017
    %v1020 = vrsqrt.pop %v1018
    %s1021 = sld [smem:[#allocation7]]
    %v1022 = vstv %s1021
    %v1023 = vmul.f32 %v1019, %v1022
    %v1024 = vmul.f32 %v1020, %v1022
    %v1025 = vmul.f32 %v999, %v1023
    %v1026 = vmul.f32 %v1000, %v1024
    %s1027 = sld [smem:[#allocation8]]
    %v1028 = vstv %s1027
    %v1029 = vadd.f32 %v1025, %v1028
    %v1030 = vadd.f32 %v1026, %v1028
    %v1031 = vmax.f32 %v1029, 0.0
    %v1032 = vmax.f32 %v1030, 0.0
    %v1035 = vcombine.low %v1031, %v1032
    %v1037 = vunpack.c.l.s4 1983009808
    %v1038 = vunpack.c.0.s8 %v1037
    %v1039 = vlaneseq
    %v1040 = vshrl.u32 %v1039, 7
    %v1041 = vsub.s32 %v1038, %v1040
    %v1042 = vrot.slane %v1035, %v1041
    %1044 = vst [vmem:[#allocation10] sm:$0xf] %v1042
    %s1045 = sld [smem:[#allocation7 + $0x1]]
    %v1046 = vstv %s1045
    %v1047 = vmul.f32 %v1019, %v1046
    %v1048 = vmul.f32 %v1020, %v1046
    %v1049 = vmul.f32 %v1001, %v1047
    %v1050 = vmul.f32 %v1002, %v1048
    %s1051 = sld [smem:[#allocation8 + $0x1]]
    %v1052 = vstv %s1051
    %v1053 = vadd.f32 %v1049, %v1052
    %v1054 = vadd.f32 %v1050, %v1052
    %v1055 = vmax.f32 %v1053, 0.0
    %v1056 = vmax.f32 %v1054, 0.0
    %v1059 = vcombine.low %v1055, %v1056
    %v1061 = vunpack.c.l.s4 1983009808
    %v1062 = vunpack.c.0.s8 %v1061
    %v1063 = vlaneseq
    %v1064 = vshrl.u32 %v1063, 7
    %v1065 = vsub.s32 %v1062, %v1064
    %v1066 = vrot.slane %v1059, %v1065
    %s1068 = scalar_lea.vmem [#allocation10], 4
    %1069 = vst [vmem:[%s1068] sm:$0xf] %v1066
    %s1070 = sld [smem:[#allocation7 + $0x2]]
    %v1071 = vstv %s1070
    %v1072 = vmul.f32 %v1019, %v1071
    %v1073 = vmul.f32 %v1020, %v1071
    %v1074 = vmul.f32 %v1003, %v1072
    %v1075 = vmul.f32 %v1004, %v1073
    %s1076 = sld [smem:[#allocation8 + $0x2]]
    %v1077 = vstv %s1076
    %v1078 = vadd.f32 %v1074, %v1077
    %v1079 = vadd.f32 %v1075, %v1077
    %v1080 = vmax.f32 %v1078, 0.0
    %v1081 = vmax.f32 %v1079, 0.0
    %v1084 = vcombine.low %v1080, %v1081
    %v1086 = vunpack.c.l.s4 1983009808
    %v1087 = vunpack.c.0.s8 %v1086
    %v1088 = vlaneseq
    %v1089 = vshrl.u32 %v1088, 7
    %v1090 = vsub.s32 %v1087, %v1089
    %v1091 = vrot.slane %v1084, %v1090
    %s1093 = scalar_lea.vmem [#allocation10], 8
    %1094 = vst [vmem:[%s1093] sm:$0xf] %v1091
    // Predicated region
    $region42: #{layernorm_model_forward.1} parent=1 // pred_check
      _
    $region43: #{layernorm_model_forward.1} parent=1 // pred_check_branch
      %1096 = sbr.rel (0) target = $region45
    $region44: #{layernorm_model_forward.1} parent=1 // pred_region
      %s1098 = ssub.s32 192, 192
      %1099 = vsyncadd [#allocation3], %s1098
      %s1100 = sshll.u32 [#allocation10], 4
      %s1101 = int_to_ptr.vmem [resolvable:$true] %s1100
      %1106 = dma.vmem_to_hbm [thread:$0]  %s1101, 192, %s6, [#allocation3], 64, 64, 4
    $region45: #{layernorm_model_forward.1} parent=1 // pred_fallthru
      _
    // Predicated region
    $region46: #{layernorm_model_forward.1} parent=1 // pred_check
      _
    $region47: #{layernorm_model_forward.1} parent=1 // pred_check_branch
      %1108 = sbr.rel (0) target = $region49
    $region48: #{layernorm_model_forward.1} parent=1 // pred_region
      %1109 = dma.done [#allocation3], 192
    $region49: #{layernorm_model_forward.1} parent=1 // pred_fallthru
      _
    %1110 = vsyncpa [#allocation3], 1
    %1111 = vsyncpa [#allocation4], 1
    %1112 = vsyncpa [#allocation6], 1
    %1113 = vsyncpa [#allocation9], 1

</llo_original>
